<compile_context>
chip_gen: v5e
topology: v5e:2x2
jax: 0.10.0
libtpu: 0.0.40
codegen_flags: <defaults>
</compile_context>

<pallas_src>
import jax
import jax.numpy as jnp
from jax import lax
from jax.experimental import pallas as pl
from jax.experimental.pallas import tpu as pltpu


def _crf_llh_kernel(em_ref, tags_ref, mask_ref, transT_ref, exp_transT_ref,
                    cmax_ref, start_ref, end_ref, llh_ref,
                    alpha, num_sc, prev_oh, last_oh):
    """One grid step == one chunk of TS timesteps for one batch tile.

    em_ref     : (TS, T, Bb)  emissions chunk (native dtype, cast in-kernel)
    tags_ref   : (TS, Bb) i32 gold tags chunk
    mask_ref   : (TS, Bb) f32 mask chunk (padded steps have mask == 0)
    transT_ref : (T, T)  trans^T           (transT[t', t] = trans[t, t'])
    exp_transT : (T, T)  exp(trans^T - cmax)
    cmax_ref   : (T, 1)  per-destination column max of trans
    start/end  : (T, 1)
    llh_ref    : (1, Bb) output: denominator - numerator (per sequence)
    scratch    : alpha (T,Bb), num_sc (1,Bb), prev_oh (T,Bb), last_oh (T,Bb)
    """
    s_chunk = pl.program_id(1)
    n_chunks = pl.num_programs(1)
    TS = em_ref.shape[0]
    T, Bb = alpha.shape

    # ---- loop-invariant loads / constants: once per chunk, not per step ----
    transT = transT_ref[...]            # (T, T)
    exp_transT = exp_transT_ref[...]    # (T, T)
    cmax = cmax_ref[...]                # (T, 1)
    iota_t = lax.broadcasted_iota(jnp.int32, (T, Bb), 0)

    def one_hot(t):                     # one-hot of tags[t] over the tag axis
        return (tags_ref[pl.ds(t, 1), :] == iota_t).astype(jnp.float32)  # (T, Bb)

    @pl.when(s_chunk == 0)
    def _init():                        # global timestep 0 (mask[:, 0] == 1)
        em0 = em_ref[0].astype(jnp.float32)          # (T, Bb)
        oh0 = one_hot(0)
        first = start_ref[...] + em0                 # (T,1) + (T,Bb)
        alpha[...] = first
        num_sc[...] = jnp.sum(oh0 * first, axis=0, keepdims=True)
        prev_oh[...] = oh0
        last_oh[...] = oh0

    def step(t):
        em_t = em_ref[t].astype(jnp.float32)          # (T, Bb)
        mk_t = mask_ref[pl.ds(t, 1), :]               # (1, Bb)
        oh_t = one_hot(t)                             # (T, Bb)

        # ---- numerator (gold path): gathers as one-hot matmuls (MXU) ----
        t_sc = jnp.sum(jnp.dot(transT, prev_oh[...],
                               preferred_element_type=jnp.float32) * oh_t,
                       axis=0, keepdims=True)         # (1, Bb) trans[prev, cur]
        e_sc = jnp.sum(oh_t * em_t, axis=0, keepdims=True)
        num_sc[...] = num_sc[...] + (t_sc + e_sc) * mk_t
        prev_oh[...] = oh_t
        # tag at the last valid (mask==1) position; contiguous-prefix masks.
        last_oh[...] = jnp.where(mk_t > 0.0, oh_t, last_oh[...])

        # ---- normalizer: forward recurrence as exp-space MXU matmul ----
        a = alpha[...]                                # (T, Bb)
        am = jnp.max(a, axis=0, keepdims=True)        # (1, Bb)
        z = jnp.dot(exp_transT, jnp.exp(a - am),
                    preferred_element_type=jnp.float32)   # (T, Bb)
        new_alpha = jnp.log(z) + cmax + am + em_t
        alpha[...] = jnp.where(mk_t > 0.0, new_alpha, a)

    # Fully unrolled inner loop over the TS timesteps of this chunk (TS is a
    # small static chunk size; equivalent to lax.fori_loop(..., unroll=True)
    # but lets the "t == 0 is the init step" case of chunk 0 be specialized).
    for t in range(TS):
        if t == 0:
            pl.when(s_chunk > 0)(lambda: step(0))
        else:
            step(t)

    @pl.when(s_chunk == n_chunks - 1)
    def _final():
        end = end_ref[...]                            # (T, 1)
        num_final = num_sc[...] + jnp.sum(last_oh[...] * end,
                                          axis=0, keepdims=True)   # (1, Bb)
        a = alpha[...] + end                          # (T, Bb)
        am = jnp.max(a, axis=0, keepdims=True)
        denom = jnp.log(jnp.sum(jnp.exp(a - am), axis=0, keepdims=True)) + am
        llh_ref[...] = denom - num_final              # (1, Bb)


def crf_forward(emissions, tags, mask, transitions, start_transitions,
                end_transitions, reduction="mean", *, ts=None, b_blk=None):
    """Equivalent of CRF.forward: returns denominator - numerator, reduced.

    Assumes (like torchcrf) that mask[:, 0] == 1 for every sequence and that
    masks are contiguous prefixes.
    """
    if reduction not in ("none", "sum", "mean", "token_mean"):
        raise ValueError(f"invalid reduction: {reduction}")
    B, S, T = emissions.shape

    if b_blk is None:
        b_blk = B                           # single batch tile by default
    if B % b_blk != 0 or not (b_blk == B or b_blk % 128 == 0):
        raise ValueError("b_blk must divide B and be == B or a multiple of 128")

    if ts is None:
        ts = min(S, 16)                     # timesteps per grid step
    ts = max(1, min(int(ts), S))
    if ts < S:                              # sublane-align per-chunk tag/mask blocks
        ts = min(S, -(-ts // 8) * 8)
    n_chunks = -(-S // ts)
    s_pad = n_chunks * ts

    # ---- glue: seq-major, tags on sublanes, batch on lanes ----
    em = jnp.transpose(emissions, (1, 2, 0))                  # (S, T, B), native dtype
    tg = jnp.transpose(tags.astype(jnp.int32), (1, 0))        # (S, B)
    mk = jnp.transpose(mask.astype(jnp.float32), (1, 0))      # (S, B)
    if s_pad != S:                                            # padded steps: mask == 0 -> no-ops
        em = jnp.pad(em, ((0, s_pad - S), (0, 0), (0, 0)))
        tg = jnp.pad(tg, ((0, s_pad - S), (0, 0)))
        mk = jnp.pad(mk, ((0, s_pad - S), (0, 0)))

    transT = jnp.transpose(transitions.astype(jnp.float32))   # transT[t', t] = trans[t, t']
    cmax = jnp.max(transT, axis=1, keepdims=True)             # (T, 1)
    exp_transT = jnp.exp(transT - cmax)                       # entries in (0, 1] -> stable
    start2 = start_transitions.astype(jnp.float32).reshape(T, 1)
    end2 = end_transitions.astype(jnp.float32).reshape(T, 1)

    # Rough VMEM budget (double-buffered emission chunk dominates); keep the
    # explicit scoped limit comfortably below v7x's 64 MiB per-core VMEM.
    em_bytes = jnp.dtype(emissions.dtype).itemsize
    est = (2 * ts * T * b_blk * em_bytes          # emissions chunk (x2 buffers)
           + 2 * ts * b_blk * (4 + 4)             # tags + mask chunks
           + 4 * T * T * 4 + 6 * T * 4            # trans^T, exp(trans^T), cmax/start/end
           + (3 * T + 1) * b_blk * 4              # scratch state
           + 2 * b_blk * 4)                       # output
    vmem_limit = int(min(48 * 2**20, max(16 * 2**20, 4 * est)))

    llh = pl.pallas_call(
        _crf_llh_kernel,
        out_shape=jax.ShapeDtypeStruct((1, B), jnp.float32),
        grid_spec=pltpu.PrefetchScalarGridSpec(
            num_scalar_prefetch=0,
            grid=(B // b_blk, n_chunks),
            in_specs=[
                pl.BlockSpec((ts, T, b_blk), lambda b, s: (s, 0, b)),  # emissions chunk
                pl.BlockSpec((ts, b_blk),    lambda b, s: (s, b)),     # tags chunk
                pl.BlockSpec((ts, b_blk),    lambda b, s: (s, b)),     # mask chunk
                pl.BlockSpec((T, T), lambda b, s: (0, 0)),             # trans^T
                pl.BlockSpec((T, T), lambda b, s: (0, 0)),             # exp(trans^T - cmax)
                pl.BlockSpec((T, 1), lambda b, s: (0, 0)),             # cmax
                pl.BlockSpec((T, 1), lambda b, s: (0, 0)),             # start
                pl.BlockSpec((T, 1), lambda b, s: (0, 0)),             # end
            ],
            out_specs=pl.BlockSpec((1, b_blk), lambda b, s: (0, b)),
            scratch_shapes=[
                pltpu.VMEM((T, b_blk), jnp.float32),   # alpha (forward scores)
                pltpu.VMEM((1, b_blk), jnp.float32),   # numerator accumulator
                pltpu.VMEM((T, b_blk), jnp.float32),   # one-hot(prev tag)
                pltpu.VMEM((T, b_blk), jnp.float32),   # one-hot(last valid tag)
            ],
        ),
        compiler_params=pltpu.CompilerParams(
            dimension_semantics=("parallel", "arbitrary"),  # batch tiles || , seq sequential
            vmem_limit_bytes=vmem_limit),
    )(em, tg, mk, transT, exp_transT, cmax, start2, end2)

    llh = llh[0]                                  # (B,)
    if reduction == "none":
        return llh
    if reduction == "sum":
        return llh.sum()
    if reduction == "mean":
        return llh.mean()
    return llh.sum() / mask.astype(jnp.float32).sum()


def crf_forward_ref(emissions, tags, mask, transitions, start_t, end_t,
                    reduction="mean"):
    """Pure-JAX reference matching the PyTorch module, for verification."""
    B, S, T = emissions.shape
    maskf = mask.astype(jnp.float32)
    ar = jnp.arange(B)
    # numerator
    score = start_t[tags[:, 0]] + emissions[ar, 0, tags[:, 0]]
    for i in range(1, S):
        score = score + transitions[tags[:, i - 1], tags[:, i]] * maskf[:, i]
        score = score + emissions[ar, i, tags[:, i]] * maskf[:, i]
    seq_ends = maskf.sum(axis=1).astype(jnp.int32) - 1
    last_tags = tags[ar, seq_ends]
    score = score + end_t[last_tags]
    # normalizer
    alpha = start_t[None, :] + emissions[:, 0]
    for i in range(1, S):
        nxt = jax.nn.logsumexp(
            alpha[:, :, None] + transitions[None] + emissions[:, i][:, None, :],
            axis=1)
        alpha = jnp.where(maskf[:, i][:, None] > 0, nxt, alpha)
    denom = jax.nn.logsumexp(alpha + end_t[None, :], axis=1)
    llh = denom - score
    if reduction == "none":
        return llh
    if reduction == "sum":
        return llh.sum()
    if reduction == "mean":
        return llh.mean()
    return llh.sum() / maskf.sum()


if __name__ == "__main__":
    B, S, T = 2, 8, 5   # batch, seq_len, num_tags (NER-sized tag set)
    key = jax.random.PRNGKey(0)
    k_em, k_tag, k_start, k_end, k_trans = jax.random.split(key, 5)

    emissions = jax.random.normal(k_em, (B, S, T), jnp.float32)
    tags = jax.random.randint(k_tag, (B, S), 0, T, dtype=jnp.int32)
    lengths = jnp.array([S, 5], dtype=jnp.int32)                 # first step on
    mask = (lax.broadcasted_iota(jnp.int32, (B, S), 1)
            < lengths[:, None]).astype(jnp.uint8)

    # deterministic "parameters" matching nn.init.uniform_(-0.1, 0.1)
    start_transitions = jax.random.uniform(k_start, (T,), jnp.float32, -0.1, 0.1)
    end_transitions = jax.random.uniform(k_end, (T,), jnp.float32, -0.1, 0.1)
    transitions = jax.random.uniform(k_trans, (T, T), jnp.float32, -0.1, 0.1)

    out = crf_forward(emissions, tags, mask, transitions,
                      start_transitions, end_transitions, reduction="mean")
    out = jax.block_until_ready(out)
    ref = crf_forward_ref(emissions, tags, mask, transitions,
                          start_transitions, end_transitions, reduction="mean")
    assert jnp.allclose(out, ref, atol=1e-4, rtol=1e-4), (out, ref)

    # Exercise the multi-chunk path (grid over sequence chunks + tail padding).
    S2 = 20
    k2 = jax.random.split(key, 4)
    em2 = jax.random.normal(k2[0], (B, S2, T), jnp.float32)
    tg2 = jax.random.randint(k2[1], (B, S2), 0, T, dtype=jnp.int32)
    len2 = jnp.array([S2, 13], dtype=jnp.int32)
    mk2 = (lax.broadcasted_iota(jnp.int32, (B, S2), 1)
           < len2[:, None]).astype(jnp.uint8)
    out2 = crf_forward(em2, tg2, mk2, transitions, start_transitions,
                       end_transitions, reduction="none", ts=8)
    out2 = jax.block_until_ready(out2)
    ref2 = crf_forward_ref(em2, tg2, mk2, transitions, start_transitions,
                           end_transitions, reduction="none")
    assert jnp.allclose(out2, ref2, atol=1e-4, rtol=1e-4), (out2, ref2)

    print("KERNEL_OK")
</pallas_src>

<mosaic_0001>
module attributes {stable_mosaic.version = 11 : i64} {
  func.func @_crf_llh_kernel(%arg0: i32, %arg1: i32, %arg2: memref<8x5x2xf32, #tpu.memory_space<vmem>>, %arg3: memref<8x2xi32, #tpu.memory_space<vmem>>, %arg4: memref<8x2xf32, #tpu.memory_space<vmem>>, %arg5: memref<5x5xf32, #tpu.memory_space<vmem>>, %arg6: memref<5x5xf32, #tpu.memory_space<vmem>>, %arg7: memref<5x1xf32, #tpu.memory_space<vmem>>, %arg8: memref<5x1xf32, #tpu.memory_space<vmem>>, %arg9: memref<5x1xf32, #tpu.memory_space<vmem>>, %arg10: memref<1x2xf32, #tpu.memory_space<vmem>>, %arg11: memref<5x2xf32, #tpu.memory_space<vmem>>, %arg12: memref<1x2xf32, #tpu.memory_space<vmem>>, %arg13: memref<5x2xf32, #tpu.memory_space<vmem>>, %arg14: memref<5x2xf32, #tpu.memory_space<vmem>>) attributes {dimension_semantics = [#tpu.dimension_semantics<parallel>, #tpu.dimension_semantics<arbitrary>], iteration_bounds = array<i64: 1, 1>, scalar_prefetch = 0 : i64, scratch_operands = 4 : i64, tpu.core_type = #tpu.core_type<tc>, window_params = [{transform_indices = @transform_0, window_bounds = array<i64: 8, 5, 2>}, {transform_indices = @transform_1, window_bounds = array<i64: 8, 2>}, {transform_indices = @transform_2, window_bounds = array<i64: 8, 2>}, {pipeline_mode = #tpu.pipeline_mode<synchronous>, transform_indices = @transform_3, window_bounds = array<i64: 5, 5>}, {pipeline_mode = #tpu.pipeline_mode<synchronous>, transform_indices = @transform_4, window_bounds = array<i64: 5, 5>}, {pipeline_mode = #tpu.pipeline_mode<synchronous>, transform_indices = @transform_5, window_bounds = array<i64: 5, 1>}, {pipeline_mode = #tpu.pipeline_mode<synchronous>, transform_indices = @transform_6, window_bounds = array<i64: 5, 1>}, {pipeline_mode = #tpu.pipeline_mode<synchronous>, transform_indices = @transform_7, window_bounds = array<i64: 5, 1>}, {transform_indices = @transform_8, window_bounds = array<i64: 1, 2>}]} {
    %c0 = arith.constant 0 : index
    %c0_0 = arith.constant 0 : index
    %0 = vector.load %arg5[%c0, %c0_0] : memref<5x5xf32, #tpu.memory_space<vmem>>, vector<5x5xf32>
    %c0_1 = arith.constant 0 : index
    %c0_2 = arith.constant 0 : index
    %1 = vector.load %arg6[%c0_1, %c0_2] : memref<5x5xf32, #tpu.memory_space<vmem>>, vector<5x5xf32>
    %c0_3 = arith.constant 0 : index
    %c0_4 = arith.constant 0 : index
    %2 = vector.load %arg7[%c0_3, %c0_4] : memref<5x1xf32, #tpu.memory_space<vmem>>, vector<5x1xf32>
    %3 = tpu.iota {dimensions = array<i32: 0>} : vector<5x2xi32>
    %c0_i32 = arith.constant 0 : i32
    %4 = arith.cmpi eq, %arg1, %c0_i32 : i32
    %5 = arith.extui %4 : i1 to i32
    %c0_i32_5 = arith.constant 0 : i32
    %6 = arith.cmpi ne, %5, %c0_i32_5 : i32
    scf.if %6 {
      %c0_212 = arith.constant 0 : index
      %c0_213 = arith.constant 0 : index
      %c0_214 = arith.constant 0 : index
      %349 = vector.load %arg2[%c0_212, %c0_213, %c0_214] : memref<8x5x2xf32, #tpu.memory_space<vmem>>, vector<1x5x2xf32>
      %350 = vector.shape_cast %349 : vector<1x5x2xf32> to vector<5x2xf32>
      %c0_215 = arith.constant 0 : index
      %c0_216 = arith.constant 0 : index
      %351 = vector.load %arg3[%c0_215, %c0_216] : memref<8x2xi32, #tpu.memory_space<vmem>>, vector<1x2xi32>
      %352 = vector.broadcast %351 : vector<1x2xi32> to vector<5x2xi32>
      %353 = arith.cmpi eq, %352, %3 : vector<5x2xi32>
      %354 = arith.extui %353 : vector<5x2xi1> to vector<5x2xi32>
      %355 = arith.sitofp %354 : vector<5x2xi32> to vector<5x2xf32>
      %c0_217 = arith.constant 0 : index
      %c0_218 = arith.constant 0 : index
      %356 = vector.load %arg8[%c0_217, %c0_218] : memref<5x1xf32, #tpu.memory_space<vmem>>, vector<5x1xf32>
      %357 = vector.broadcast %356 : vector<5x1xf32> to vector<5x2xf32>
      %358 = arith.addf %357, %350 : vector<5x2xf32>
      %c0_219 = arith.constant 0 : index
      %c0_220 = arith.constant 0 : index
      %359 = vector.load %arg11[%c0_219, %c0_220] : memref<5x2xf32, #tpu.memory_space<vmem>>, vector<5x2xf32>
      tpu.vector_store %arg11[%c0_219, %c0_220], %358 {strides = array<i32>} : memref<5x2xf32, #tpu.memory_space<vmem>>, vector<5x2xf32>,
      %360 = arith.mulf %355, %358 : vector<5x2xf32>
      %cst_221 = arith.constant dense<0.000000e+00> : vector<2xf32>
      %361 = vector.multi_reduction <add>, %360, %cst_221 [0] : vector<5x2xf32> to vector<2xf32>
      %362 = vector.shape_cast %361 : vector<2xf32> to vector<1x2xf32>
      %c0_222 = arith.constant 0 : index
      %c0_223 = arith.constant 0 : index
      %363 = vector.load %arg12[%c0_222, %c0_223] : memref<1x2xf32, #tpu.memory_space<vmem>>, vector<1x2xf32>
      tpu.vector_store %arg12[%c0_222, %c0_223], %362 {strides = array<i32>} : memref<1x2xf32, #tpu.memory_space<vmem>>, vector<1x2xf32>,
      %c0_224 = arith.constant 0 : index
      %c0_225 = arith.constant 0 : index
      %364 = vector.load %arg13[%c0_224, %c0_225] : memref<5x2xf32, #tpu.memory_space<vmem>>, vector<5x2xf32>
      tpu.vector_store %arg13[%c0_224, %c0_225], %355 {strides = array<i32>} : memref<5x2xf32, #tpu.memory_space<vmem>>, vector<5x2xf32>,
      %c0_226 = arith.constant 0 : index
      %c0_227 = arith.constant 0 : index
      %365 = vector.load %arg14[%c0_226, %c0_227] : memref<5x2xf32, #tpu.memory_space<vmem>>, vector<5x2xf32>
      tpu.vector_store %arg14[%c0_226, %c0_227], %355 {strides = array<i32>} : memref<5x2xf32, #tpu.memory_space<vmem>>, vector<5x2xf32>,
    } else {
    }
    %c0_i32_6 = arith.constant 0 : i32
    %7 = arith.cmpi sgt, %arg1, %c0_i32_6 : i32
    %8 = arith.extui %7 : i1 to i32
    %c0_i32_7 = arith.constant 0 : i32
    %9 = arith.cmpi ne, %8, %c0_i32_7 : i32
    scf.if %9 {
      %c0_212 = arith.constant 0 : index
      %c0_213 = arith.constant 0 : index
      %c0_214 = arith.constant 0 : index
      %349 = vector.load %arg2[%c0_212, %c0_213, %c0_214] : memref<8x5x2xf32, #tpu.memory_space<vmem>>, vector<1x5x2xf32>
      %350 = vector.shape_cast %349 : vector<1x5x2xf32> to vector<5x2xf32>
      %c0_215 = arith.constant 0 : index
      %c0_216 = arith.constant 0 : index
      %351 = vector.load %arg4[%c0_215, %c0_216] : memref<8x2xf32, #tpu.memory_space<vmem>>, vector<1x2xf32>
      %c0_217 = arith.constant 0 : index
      %c0_218 = arith.constant 0 : index
      %352 = vector.load %arg3[%c0_217, %c0_218] : memref<8x2xi32, #tpu.memory_space<vmem>>, vector<1x2xi32>
      %353 = vector.broadcast %352 : vector<1x2xi32> to vector<5x2xi32>
      %354 = arith.cmpi eq, %353, %3 : vector<5x2xi32>
      %355 = arith.extui %354 : vector<5x2xi1> to vector<5x2xi32>
      %356 = arith.sitofp %355 : vector<5x2xi32> to vector<5x2xf32>
      %c0_219 = arith.constant 0 : index
      %c0_220 = arith.constant 0 : index
      %357 = vector.load %arg13[%c0_219, %c0_220] : memref<5x2xf32, #tpu.memory_space<vmem>>, vector<5x2xf32>
      %cst_221 = arith.constant dense<0.000000e+00> : vector<5x2xf32>
      %358 = tpu.matmul %0, %357, %cst_221 {dimension_numbers = #tpu.dot_dimension_numbers<[1], [0], [0], [1], [0, 0, 1, 1], [], []>} : vector<5x5xf32>, vector<5x2xf32>, vector<5x2xf32> -> vector<5x2xf32>
      %359 = arith.mulf %358, %356 : vector<5x2xf32>
      %cst_222 = arith.constant dense<0.000000e+00> : vector<2xf32>
      %360 = vector.multi_reduction <add>, %359, %cst_222 [0] : vector<5x2xf32> to vector<2xf32>
      %361 = vector.shape_cast %360 : vector<2xf32> to vector<1x2xf32>
      %362 = arith.mulf %356, %350 : vector<5x2xf32>
      %cst_223 = arith.constant dense<0.000000e+00> : vector<2xf32>
      %363 = vector.multi_reduction <add>, %362, %cst_223 [0] : vector<5x2xf32> to vector<2xf32>
      %364 = vector.shape_cast %363 : vector<2xf32> to vector<1x2xf32>
      %c0_224 = arith.constant 0 : index
      %c0_225 = arith.constant 0 : index
      %365 = vector.load %arg12[%c0_224, %c0_225] : memref<1x2xf32, #tpu.memory_space<vmem>>, vector<1x2xf32>
      %366 = arith.addf %361, %364 : vector<1x2xf32>
      %367 = arith.mulf %366, %351 : vector<1x2xf32>
      %368 = arith.addf %365, %367 : vector<1x2xf32>
      %c0_226 = arith.constant 0 : index
      %c0_227 = arith.constant 0 : index
      %369 = vector.load %arg12[%c0_226, %c0_227] : memref<1x2xf32, #tpu.memory_space<vmem>>, vector<1x2xf32>
      tpu.vector_store %arg12[%c0_226, %c0_227], %368 {strides = array<i32>} : memref<1x2xf32, #tpu.memory_space<vmem>>, vector<1x2xf32>,
      %c0_228 = arith.constant 0 : index
      %c0_229 = arith.constant 0 : index
      %370 = vector.load %arg13[%c0_228, %c0_229] : memref<5x2xf32, #tpu.memory_space<vmem>>, vector<5x2xf32>
      tpu.vector_store %arg13[%c0_228, %c0_229], %356 {strides = array<i32>} : memref<5x2xf32, #tpu.memory_space<vmem>>, vector<5x2xf32>,
      %cst_230 = arith.constant 0.000000e+00 : f32
      %371 = vector.broadcast %cst_230 : f32 to vector<1x2xf32>
      %372 = arith.cmpf ogt, %351, %371 : vector<1x2xf32>
      %c0_231 = arith.constant 0 : index
      %c0_232 = arith.constant 0 : index
      %373 = vector.load %arg14[%c0_231, %c0_232] : memref<5x2xf32, #tpu.memory_space<vmem>>, vector<5x2xf32>
      %374 = vector.shape_cast %372 : vector<1x2xi1> to vector<1x2xi1>
      %375 = vector.broadcast %374 : vector<1x2xi1> to vector<5x2xi1>
      %376 = arith.select %375, %356, %373 : vector<5x2xi1>, vector<5x2xf32>
      %c0_233 = arith.constant 0 : index
      %c0_234 = arith.constant 0 : index
      %377 = vector.load %arg14[%c0_233, %c0_234] : memref<5x2xf32, #tpu.memory_space<vmem>>, vector<5x2xf32>
      tpu.vector_store %arg14[%c0_233, %c0_234], %376 {strides = array<i32>} : memref<5x2xf32, #tpu.memory_space<vmem>>, vector<5x2xf32>,
      %c0_235 = arith.constant 0 : index
      %c0_236 = arith.constant 0 : index
      %378 = vector.load %arg11[%c0_235, %c0_236] : memref<5x2xf32, #tpu.memory_space<vmem>>, vector<5x2xf32>
      %cst_237 = arith.constant dense<0xFF800000> : vector<2xf32>
      %379 = vector.multi_reduction <maximumf>, %378, %cst_237 [0] : vector<5x2xf32> to vector<2xf32>
      %380 = vector.shape_cast %379 : vector<2xf32> to vector<1x2xf32>
      %381 = vector.broadcast %380 : vector<1x2xf32> to vector<5x2xf32>
      %382 = arith.subf %378, %381 : vector<5x2xf32>
      %383 = math.exp %382 : vector<5x2xf32>
      %cst_238 = arith.constant dense<0.000000e+00> : vector<5x2xf32>
      %384 = tpu.matmul %1, %383, %cst_238 {dimension_numbers = #tpu.dot_dimension_numbers<[1], [0], [0], [1], [0, 0, 1, 1], [], []>} : vector<5x5xf32>, vector<5x2xf32>, vector<5x2xf32> -> vector<5x2xf32>
      %385 = math.log %384 : vector<5x2xf32>
      %386 = vector.broadcast %2 : vector<5x1xf32> to vector<5x2xf32>
      %387 = arith.addf %385, %386 : vector<5x2xf32>
      %388 = vector.broadcast %380 : vector<1x2xf32> to vector<5x2xf32>
      %389 = arith.addf %387, %388 : vector<5x2xf32>
      %390 = arith.addf %389, %350 : vector<5x2xf32>
      %cst_239 = arith.constant 0.000000e+00 : f32
      %391 = vector.broadcast %cst_239 : f32 to vector<1x2xf32>
      %392 = arith.cmpf ogt, %351, %391 : vector<1x2xf32>
      %393 = vector.shape_cast %392 : vector<1x2xi1> to vector<1x2xi1>
      %394 = vector.broadcast %393 : vector<1x2xi1> to vector<5x2xi1>
      %395 = arith.select %394, %390, %378 : vector<5x2xi1>, vector<5x2xf32>
      %c0_240 = arith.constant 0 : index
      %c0_241 = arith.constant 0 : index
      %396 = vector.load %arg11[%c0_240, %c0_241] : memref<5x2xf32, #tpu.memory_space<vmem>>, vector<5x2xf32>
      tpu.vector_store %arg11[%c0_240, %c0_241], %395 {strides = array<i32>} : memref<5x2xf32, #tpu.memory_space<vmem>>, vector<5x2xf32>,
    } else {
    }
    %c1 = arith.constant 1 : index
    %c0_8 = arith.constant 0 : index
    %c0_9 = arith.constant 0 : index
    %10 = vector.load %arg2[%c1, %c0_8, %c0_9] : memref<8x5x2xf32, #tpu.memory_space<vmem>>, vector<1x5x2xf32>
    %11 = vector.shape_cast %10 : vector<1x5x2xf32> to vector<5x2xf32>
    %c1_10 = arith.constant 1 : index
    %c0_11 = arith.constant 0 : index
    %12 = vector.load %arg4[%c1_10, %c0_11] : memref<8x2xf32, #tpu.memory_space<vmem>>, vector<1x2xf32>
    %c1_12 = arith.constant 1 : index
    %c0_13 = arith.constant 0 : index
    %13 = vector.load %arg3[%c1_12, %c0_13] : memref<8x2xi32, #tpu.memory_space<vmem>>, vector<1x2xi32>
    %14 = vector.broadcast %13 : vector<1x2xi32> to vector<5x2xi32>
    %15 = arith.cmpi eq, %14, %3 : vector<5x2xi32>
    %16 = arith.extui %15 : vector<5x2xi1> to vector<5x2xi32>
    %17 = arith.sitofp %16 : vector<5x2xi32> to vector<5x2xf32>
    %c0_14 = arith.constant 0 : index
    %c0_15 = arith.constant 0 : index
    %18 = vector.load %arg13[%c0_14, %c0_15] : memref<5x2xf32, #tpu.memory_space<vmem>>, vector<5x2xf32>
    %cst = arith.constant dense<0.000000e+00> : vector<5x2xf32>
    %19 = tpu.matmul %0, %18, %cst {dimension_numbers = #tpu.dot_dimension_numbers<[1], [0], [0], [1], [0, 0, 1, 1], [], []>} : vector<5x5xf32>, vector<5x2xf32>, vector<5x2xf32> -> vector<5x2xf32>
    %20 = arith.mulf %19, %17 : vector<5x2xf32>
    %cst_16 = arith.constant dense<0.000000e+00> : vector<2xf32>
    %21 = vector.multi_reduction <add>, %20, %cst_16 [0] : vector<5x2xf32> to vector<2xf32>
    %22 = vector.shape_cast %21 : vector<2xf32> to vector<1x2xf32>
    %23 = arith.mulf %17, %11 : vector<5x2xf32>
    %cst_17 = arith.constant dense<0.000000e+00> : vector<2xf32>
    %24 = vector.multi_reduction <add>, %23, %cst_17 [0] : vector<5x2xf32> to vector<2xf32>
    %25 = vector.shape_cast %24 : vector<2xf32> to vector<1x2xf32>
    %c0_18 = arith.constant 0 : index
    %c0_19 = arith.constant 0 : index
    %26 = vector.load %arg12[%c0_18, %c0_19] : memref<1x2xf32, #tpu.memory_space<vmem>>, vector<1x2xf32>
    %27 = arith.addf %22, %25 : vector<1x2xf32>
    %28 = arith.mulf %27, %12 : vector<1x2xf32>
    %29 = arith.addf %26, %28 : vector<1x2xf32>
    %c0_20 = arith.constant 0 : index
    %c0_21 = arith.constant 0 : index
    %30 = vector.load %arg12[%c0_20, %c0_21] : memref<1x2xf32, #tpu.memory_space<vmem>>, vector<1x2xf32>
    tpu.vector_store %arg12[%c0_20, %c0_21], %29 {strides = array<i32>} : memref<1x2xf32, #tpu.memory_space<vmem>>, vector<1x2xf32>,
    %c0_22 = arith.constant 0 : index
    %c0_23 = arith.constant 0 : index
    %31 = vector.load %arg13[%c0_22, %c0_23] : memref<5x2xf32, #tpu.memory_space<vmem>>, vector<5x2xf32>
    tpu.vector_store %arg13[%c0_22, %c0_23], %17 {strides = array<i32>} : memref<5x2xf32, #tpu.memory_space<vmem>>, vector<5x2xf32>,
    %cst_24 = arith.constant 0.000000e+00 : f32
    %32 = vector.broadcast %cst_24 : f32 to vector<1x2xf32>
    %33 = arith.cmpf ogt, %12, %32 : vector<1x2xf32>
    %c0_25 = arith.constant 0 : index
    %c0_26 = arith.constant 0 : index
    %34 = vector.load %arg14[%c0_25, %c0_26] : memref<5x2xf32, #tpu.memory_space<vmem>>, vector<5x2xf32>
    %35 = vector.shape_cast %33 : vector<1x2xi1> to vector<1x2xi1>
    %36 = vector.broadcast %35 : vector<1x2xi1> to vector<5x2xi1>
    %37 = arith.select %36, %17, %34 : vector<5x2xi1>, vector<5x2xf32>
    %c0_27 = arith.constant 0 : index
    %c0_28 = arith.constant 0 : index
    %38 = vector.load %arg14[%c0_27, %c0_28] : memref<5x2xf32, #tpu.memory_space<vmem>>, vector<5x2xf32>
    tpu.vector_store %arg14[%c0_27, %c0_28], %37 {strides = array<i32>} : memref<5x2xf32, #tpu.memory_space<vmem>>, vector<5x2xf32>,
    %c0_29 = arith.constant 0 : index
    %c0_30 = arith.constant 0 : index
    %39 = vector.load %arg11[%c0_29, %c0_30] : memref<5x2xf32, #tpu.memory_space<vmem>>, vector<5x2xf32>
    %cst_31 = arith.constant dense<0xFF800000> : vector<2xf32>
    %40 = vector.multi_reduction <maximumf>, %39, %cst_31 [0] : vector<5x2xf32> to vector<2xf32>
    %41 = vector.shape_cast %40 : vector<2xf32> to vector<1x2xf32>
    %42 = vector.broadcast %41 : vector<1x2xf32> to vector<5x2xf32>
    %43 = arith.subf %39, %42 : vector<5x2xf32>
    %44 = math.exp %43 : vector<5x2xf32>
    %cst_32 = arith.constant dense<0.000000e+00> : vector<5x2xf32>
    %45 = tpu.matmul %1, %44, %cst_32 {dimension_numbers = #tpu.dot_dimension_numbers<[1], [0], [0], [1], [0, 0, 1, 1], [], []>} : vector<5x5xf32>, vector<5x2xf32>, vector<5x2xf32> -> vector<5x2xf32>
    %46 = math.log %45 : vector<5x2xf32>
    %47 = vector.broadcast %2 : vector<5x1xf32> to vector<5x2xf32>
    %48 = arith.addf %46, %47 : vector<5x2xf32>
    %49 = vector.broadcast %41 : vector<1x2xf32> to vector<5x2xf32>
    %50 = arith.addf %48, %49 : vector<5x2xf32>
    %51 = arith.addf %50, %11 : vector<5x2xf32>
    %cst_33 = arith.constant 0.000000e+00 : f32
    %52 = vector.broadcast %cst_33 : f32 to vector<1x2xf32>
    %53 = arith.cmpf ogt, %12, %52 : vector<1x2xf32>
    %54 = vector.shape_cast %53 : vector<1x2xi1> to vector<1x2xi1>
    %55 = vector.broadcast %54 : vector<1x2xi1> to vector<5x2xi1>
    %56 = arith.select %55, %51, %39 : vector<5x2xi1>, vector<5x2xf32>
    %c0_34 = arith.constant 0 : index
    %c0_35 = arith.constant 0 : index
    %57 = vector.load %arg11[%c0_34, %c0_35] : memref<5x2xf32, #tpu.memory_space<vmem>>, vector<5x2xf32>
    tpu.vector_store %arg11[%c0_34, %c0_35], %56 {strides = array<i32>} : memref<5x2xf32, #tpu.memory_space<vmem>>, vector<5x2xf32>,
    %c2 = arith.constant 2 : index
    %c0_36 = arith.constant 0 : index
    %c0_37 = arith.constant 0 : index
    %58 = vector.load %arg2[%c2, %c0_36, %c0_37] : memref<8x5x2xf32, #tpu.memory_space<vmem>>, vector<1x5x2xf32>
    %59 = vector.shape_cast %58 : vector<1x5x2xf32> to vector<5x2xf32>
    %c2_38 = arith.constant 2 : index
    %c0_39 = arith.constant 0 : index
    %60 = vector.load %arg4[%c2_38, %c0_39] : memref<8x2xf32, #tpu.memory_space<vmem>>, vector<1x2xf32>
    %c2_40 = arith.constant 2 : index
    %c0_41 = arith.constant 0 : index
    %61 = vector.load %arg3[%c2_40, %c0_41] : memref<8x2xi32, #tpu.memory_space<vmem>>, vector<1x2xi32>
    %62 = vector.broadcast %61 : vector<1x2xi32> to vector<5x2xi32>
    %63 = arith.cmpi eq, %62, %3 : vector<5x2xi32>
    %64 = arith.extui %63 : vector<5x2xi1> to vector<5x2xi32>
    %65 = arith.sitofp %64 : vector<5x2xi32> to vector<5x2xf32>
    %c0_42 = arith.constant 0 : index
    %c0_43 = arith.constant 0 : index
    %66 = vector.load %arg13[%c0_42, %c0_43] : memref<5x2xf32, #tpu.memory_space<vmem>>, vector<5x2xf32>
    %cst_44 = arith.constant dense<0.000000e+00> : vector<5x2xf32>
    %67 = tpu.matmul %0, %66, %cst_44 {dimension_numbers = #tpu.dot_dimension_numbers<[1], [0], [0], [1], [0, 0, 1, 1], [], []>} : vector<5x5xf32>, vector<5x2xf32>, vector<5x2xf32> -> vector<5x2xf32>
    %68 = arith.mulf %67, %65 : vector<5x2xf32>
    %cst_45 = arith.constant dense<0.000000e+00> : vector<2xf32>
    %69 = vector.multi_reduction <add>, %68, %cst_45 [0] : vector<5x2xf32> to vector<2xf32>
    %70 = vector.shape_cast %69 : vector<2xf32> to vector<1x2xf32>
    %71 = arith.mulf %65, %59 : vector<5x2xf32>
    %cst_46 = arith.constant dense<0.000000e+00> : vector<2xf32>
    %72 = vector.multi_reduction <add>, %71, %cst_46 [0] : vector<5x2xf32> to vector<2xf32>
    %73 = vector.shape_cast %72 : vector<2xf32> to vector<1x2xf32>
    %c0_47 = arith.constant 0 : index
    %c0_48 = arith.constant 0 : index
    %74 = vector.load %arg12[%c0_47, %c0_48] : memref<1x2xf32, #tpu.memory_space<vmem>>, vector<1x2xf32>
    %75 = arith.addf %70, %73 : vector<1x2xf32>
    %76 = arith.mulf %75, %60 : vector<1x2xf32>
    %77 = arith.addf %74, %76 : vector<1x2xf32>
    %c0_49 = arith.constant 0 : index
    %c0_50 = arith.constant 0 : index
    %78 = vector.load %arg12[%c0_49, %c0_50] : memref<1x2xf32, #tpu.memory_space<vmem>>, vector<1x2xf32>
    tpu.vector_store %arg12[%c0_49, %c0_50], %77 {strides = array<i32>} : memref<1x2xf32, #tpu.memory_space<vmem>>, vector<1x2xf32>,
    %c0_51 = arith.constant 0 : index
    %c0_52 = arith.constant 0 : index
    %79 = vector.load %arg13[%c0_51, %c0_52] : memref<5x2xf32, #tpu.memory_space<vmem>>, vector<5x2xf32>
    tpu.vector_store %arg13[%c0_51, %c0_52], %65 {strides = array<i32>} : memref<5x2xf32, #tpu.memory_space<vmem>>, vector<5x2xf32>,
    %cst_53 = arith.constant 0.000000e+00 : f32
    %80 = vector.broadcast %cst_53 : f32 to vector<1x2xf32>
    %81 = arith.cmpf ogt, %60, %80 : vector<1x2xf32>
    %c0_54 = arith.constant 0 : index
    %c0_55 = arith.constant 0 : index
    %82 = vector.load %arg14[%c0_54, %c0_55] : memref<5x2xf32, #tpu.memory_space<vmem>>, vector<5x2xf32>
    %83 = vector.shape_cast %81 : vector<1x2xi1> to vector<1x2xi1>
    %84 = vector.broadcast %83 : vector<1x2xi1> to vector<5x2xi1>
    %85 = arith.select %84, %65, %82 : vector<5x2xi1>, vector<5x2xf32>
    %c0_56 = arith.constant 0 : index
    %c0_57 = arith.constant 0 : index
    %86 = vector.load %arg14[%c0_56, %c0_57] : memref<5x2xf32, #tpu.memory_space<vmem>>, vector<5x2xf32>
    tpu.vector_store %arg14[%c0_56, %c0_57], %85 {strides = array<i32>} : memref<5x2xf32, #tpu.memory_space<vmem>>, vector<5x2xf32>,
    %c0_58 = arith.constant 0 : index
    %c0_59 = arith.constant 0 : index
    %87 = vector.load %arg11[%c0_58, %c0_59] : memref<5x2xf32, #tpu.memory_space<vmem>>, vector<5x2xf32>
    %cst_60 = arith.constant dense<0xFF800000> : vector<2xf32>
    %88 = vector.multi_reduction <maximumf>, %87, %cst_60 [0] : vector<5x2xf32> to vector<2xf32>
    %89 = vector.shape_cast %88 : vector<2xf32> to vector<1x2xf32>
    %90 = vector.broadcast %89 : vector<1x2xf32> to vector<5x2xf32>
    %91 = arith.subf %87, %90 : vector<5x2xf32>
    %92 = math.exp %91 : vector<5x2xf32>
    %cst_61 = arith.constant dense<0.000000e+00> : vector<5x2xf32>
    %93 = tpu.matmul %1, %92, %cst_61 {dimension_numbers = #tpu.dot_dimension_numbers<[1], [0], [0], [1], [0, 0, 1, 1], [], []>} : vector<5x5xf32>, vector<5x2xf32>, vector<5x2xf32> -> vector<5x2xf32>
    %94 = math.log %93 : vector<5x2xf32>
    %95 = vector.broadcast %2 : vector<5x1xf32> to vector<5x2xf32>
    %96 = arith.addf %94, %95 : vector<5x2xf32>
    %97 = vector.broadcast %89 : vector<1x2xf32> to vector<5x2xf32>
    %98 = arith.addf %96, %97 : vector<5x2xf32>
    %99 = arith.addf %98, %59 : vector<5x2xf32>
    %cst_62 = arith.constant 0.000000e+00 : f32
    %100 = vector.broadcast %cst_62 : f32 to vector<1x2xf32>
    %101 = arith.cmpf ogt, %60, %100 : vector<1x2xf32>
    %102 = vector.shape_cast %101 : vector<1x2xi1> to vector<1x2xi1>
    %103 = vector.broadcast %102 : vector<1x2xi1> to vector<5x2xi1>
    %104 = arith.select %103, %99, %87 : vector<5x2xi1>, vector<5x2xf32>
    %c0_63 = arith.constant 0 : index
    %c0_64 = arith.constant 0 : index
    %105 = vector.load %arg11[%c0_63, %c0_64] : memref<5x2xf32, #tpu.memory_space<vmem>>, vector<5x2xf32>
    tpu.vector_store %arg11[%c0_63, %c0_64], %104 {strides = array<i32>} : memref<5x2xf32, #tpu.memory_space<vmem>>, vector<5x2xf32>,
    %c3 = arith.constant 3 : index
    %c0_65 = arith.constant 0 : index
    %c0_66 = arith.constant 0 : index
    %106 = vector.load %arg2[%c3, %c0_65, %c0_66] : memref<8x5x2xf32, #tpu.memory_space<vmem>>, vector<1x5x2xf32>
    %107 = vector.shape_cast %106 : vector<1x5x2xf32> to vector<5x2xf32>
    %c3_67 = arith.constant 3 : index
    %c0_68 = arith.constant 0 : index
    %108 = vector.load %arg4[%c3_67, %c0_68] : memref<8x2xf32, #tpu.memory_space<vmem>>, vector<1x2xf32>
    %c3_69 = arith.constant 3 : index
    %c0_70 = arith.constant 0 : index
    %109 = vector.load %arg3[%c3_69, %c0_70] : memref<8x2xi32, #tpu.memory_space<vmem>>, vector<1x2xi32>
    %110 = vector.broadcast %109 : vector<1x2xi32> to vector<5x2xi32>
    %111 = arith.cmpi eq, %110, %3 : vector<5x2xi32>
    %112 = arith.extui %111 : vector<5x2xi1> to vector<5x2xi32>
    %113 = arith.sitofp %112 : vector<5x2xi32> to vector<5x2xf32>
    %c0_71 = arith.constant 0 : index
    %c0_72 = arith.constant 0 : index
    %114 = vector.load %arg13[%c0_71, %c0_72] : memref<5x2xf32, #tpu.memory_space<vmem>>, vector<5x2xf32>
    %cst_73 = arith.constant dense<0.000000e+00> : vector<5x2xf32>
    %115 = tpu.matmul %0, %114, %cst_73 {dimension_numbers = #tpu.dot_dimension_numbers<[1], [0], [0], [1], [0, 0, 1, 1], [], []>} : vector<5x5xf32>, vector<5x2xf32>, vector<5x2xf32> -> vector<5x2xf32>
    %116 = arith.mulf %115, %113 : vector<5x2xf32>
    %cst_74 = arith.constant dense<0.000000e+00> : vector<2xf32>
    %117 = vector.multi_reduction <add>, %116, %cst_74 [0] : vector<5x2xf32> to vector<2xf32>
    %118 = vector.shape_cast %117 : vector<2xf32> to vector<1x2xf32>
    %119 = arith.mulf %113, %107 : vector<5x2xf32>
    %cst_75 = arith.constant dense<0.000000e+00> : vector<2xf32>
    %120 = vector.multi_reduction <add>, %119, %cst_75 [0] : vector<5x2xf32> to vector<2xf32>
    %121 = vector.shape_cast %120 : vector<2xf32> to vector<1x2xf32>
    %c0_76 = arith.constant 0 : index
    %c0_77 = arith.constant 0 : index
    %122 = vector.load %arg12[%c0_76, %c0_77] : memref<1x2xf32, #tpu.memory_space<vmem>>, vector<1x2xf32>
    %123 = arith.addf %118, %121 : vector<1x2xf32>
    %124 = arith.mulf %123, %108 : vector<1x2xf32>
    %125 = arith.addf %122, %124 : vector<1x2xf32>
    %c0_78 = arith.constant 0 : index
    %c0_79 = arith.constant 0 : index
    %126 = vector.load %arg12[%c0_78, %c0_79] : memref<1x2xf32, #tpu.memory_space<vmem>>, vector<1x2xf32>
    tpu.vector_store %arg12[%c0_78, %c0_79], %125 {strides = array<i32>} : memref<1x2xf32, #tpu.memory_space<vmem>>, vector<1x2xf32>,
    %c0_80 = arith.constant 0 : index
    %c0_81 = arith.constant 0 : index
    %127 = vector.load %arg13[%c0_80, %c0_81] : memref<5x2xf32, #tpu.memory_space<vmem>>, vector<5x2xf32>
    tpu.vector_store %arg13[%c0_80, %c0_81], %113 {strides = array<i32>} : memref<5x2xf32, #tpu.memory_space<vmem>>, vector<5x2xf32>,
    %cst_82 = arith.constant 0.000000e+00 : f32
    %128 = vector.broadcast %cst_82 : f32 to vector<1x2xf32>
    %129 = arith.cmpf ogt, %108, %128 : vector<1x2xf32>
    %c0_83 = arith.constant 0 : index
    %c0_84 = arith.constant 0 : index
    %130 = vector.load %arg14[%c0_83, %c0_84] : memref<5x2xf32, #tpu.memory_space<vmem>>, vector<5x2xf32>
    %131 = vector.shape_cast %129 : vector<1x2xi1> to vector<1x2xi1>
    %132 = vector.broadcast %131 : vector<1x2xi1> to vector<5x2xi1>
    %133 = arith.select %132, %113, %130 : vector<5x2xi1>, vector<5x2xf32>
    %c0_85 = arith.constant 0 : index
    %c0_86 = arith.constant 0 : index
    %134 = vector.load %arg14[%c0_85, %c0_86] : memref<5x2xf32, #tpu.memory_space<vmem>>, vector<5x2xf32>
    tpu.vector_store %arg14[%c0_85, %c0_86], %133 {strides = array<i32>} : memref<5x2xf32, #tpu.memory_space<vmem>>, vector<5x2xf32>,
    %c0_87 = arith.constant 0 : index
    %c0_88 = arith.constant 0 : index
    %135 = vector.load %arg11[%c0_87, %c0_88] : memref<5x2xf32, #tpu.memory_space<vmem>>, vector<5x2xf32>
    %cst_89 = arith.constant dense<0xFF800000> : vector<2xf32>
    %136 = vector.multi_reduction <maximumf>, %135, %cst_89 [0] : vector<5x2xf32> to vector<2xf32>
    %137 = vector.shape_cast %136 : vector<2xf32> to vector<1x2xf32>
    %138 = vector.broadcast %137 : vector<1x2xf32> to vector<5x2xf32>
    %139 = arith.subf %135, %138 : vector<5x2xf32>
    %140 = math.exp %139 : vector<5x2xf32>
    %cst_90 = arith.constant dense<0.000000e+00> : vector<5x2xf32>
    %141 = tpu.matmul %1, %140, %cst_90 {dimension_numbers = #tpu.dot_dimension_numbers<[1], [0], [0], [1], [0, 0, 1, 1], [], []>} : vector<5x5xf32>, vector<5x2xf32>, vector<5x2xf32> -> vector<5x2xf32>
    %142 = math.log %141 : vector<5x2xf32>
    %143 = vector.broadcast %2 : vector<5x1xf32> to vector<5x2xf32>
    %144 = arith.addf %142, %143 : vector<5x2xf32>
    %145 = vector.broadcast %137 : vector<1x2xf32> to vector<5x2xf32>
    %146 = arith.addf %144, %145 : vector<5x2xf32>
    %147 = arith.addf %146, %107 : vector<5x2xf32>
    %cst_91 = arith.constant 0.000000e+00 : f32
    %148 = vector.broadcast %cst_91 : f32 to vector<1x2xf32>
    %149 = arith.cmpf ogt, %108, %148 : vector<1x2xf32>
    %150 = vector.shape_cast %149 : vector<1x2xi1> to vector<1x2xi1>
    %151 = vector.broadcast %150 : vector<1x2xi1> to vector<5x2xi1>
    %152 = arith.select %151, %147, %135 : vector<5x2xi1>, vector<5x2xf32>
    %c0_92 = arith.constant 0 : index
    %c0_93 = arith.constant 0 : index
    %153 = vector.load %arg11[%c0_92, %c0_93] : memref<5x2xf32, #tpu.memory_space<vmem>>, vector<5x2xf32>
    tpu.vector_store %arg11[%c0_92, %c0_93], %152 {strides = array<i32>} : memref<5x2xf32, #tpu.memory_space<vmem>>, vector<5x2xf32>,
    %c4 = arith.constant 4 : index
    %c0_94 = arith.constant 0 : index
    %c0_95 = arith.constant 0 : index
    %154 = vector.load %arg2[%c4, %c0_94, %c0_95] : memref<8x5x2xf32, #tpu.memory_space<vmem>>, vector<1x5x2xf32>
    %155 = vector.shape_cast %154 : vector<1x5x2xf32> to vector<5x2xf32>
    %c4_96 = arith.constant 4 : index
    %c0_97 = arith.constant 0 : index
    %156 = vector.load %arg4[%c4_96, %c0_97] : memref<8x2xf32, #tpu.memory_space<vmem>>, vector<1x2xf32>
    %c4_98 = arith.constant 4 : index
    %c0_99 = arith.constant 0 : index
    %157 = vector.load %arg3[%c4_98, %c0_99] : memref<8x2xi32, #tpu.memory_space<vmem>>, vector<1x2xi32>
    %158 = vector.broadcast %157 : vector<1x2xi32> to vector<5x2xi32>
    %159 = arith.cmpi eq, %158, %3 : vector<5x2xi32>
    %160 = arith.extui %159 : vector<5x2xi1> to vector<5x2xi32>
    %161 = arith.sitofp %160 : vector<5x2xi32> to vector<5x2xf32>
    %c0_100 = arith.constant 0 : index
    %c0_101 = arith.constant 0 : index
    %162 = vector.load %arg13[%c0_100, %c0_101] : memref<5x2xf32, #tpu.memory_space<vmem>>, vector<5x2xf32>
    %cst_102 = arith.constant dense<0.000000e+00> : vector<5x2xf32>
    %163 = tpu.matmul %0, %162, %cst_102 {dimension_numbers = #tpu.dot_dimension_numbers<[1], [0], [0], [1], [0, 0, 1, 1], [], []>} : vector<5x5xf32>, vector<5x2xf32>, vector<5x2xf32> -> vector<5x2xf32>
    %164 = arith.mulf %163, %161 : vector<5x2xf32>
    %cst_103 = arith.constant dense<0.000000e+00> : vector<2xf32>
    %165 = vector.multi_reduction <add>, %164, %cst_103 [0] : vector<5x2xf32> to vector<2xf32>
    %166 = vector.shape_cast %165 : vector<2xf32> to vector<1x2xf32>
    %167 = arith.mulf %161, %155 : vector<5x2xf32>
    %cst_104 = arith.constant dense<0.000000e+00> : vector<2xf32>
    %168 = vector.multi_reduction <add>, %167, %cst_104 [0] : vector<5x2xf32> to vector<2xf32>
    %169 = vector.shape_cast %168 : vector<2xf32> to vector<1x2xf32>
    %c0_105 = arith.constant 0 : index
    %c0_106 = arith.constant 0 : index
    %170 = vector.load %arg12[%c0_105, %c0_106] : memref<1x2xf32, #tpu.memory_space<vmem>>, vector<1x2xf32>
    %171 = arith.addf %166, %169 : vector<1x2xf32>
    %172 = arith.mulf %171, %156 : vector<1x2xf32>
    %173 = arith.addf %170, %172 : vector<1x2xf32>
    %c0_107 = arith.constant 0 : index
    %c0_108 = arith.constant 0 : index
    %174 = vector.load %arg12[%c0_107, %c0_108] : memref<1x2xf32, #tpu.memory_space<vmem>>, vector<1x2xf32>
    tpu.vector_store %arg12[%c0_107, %c0_108], %173 {strides = array<i32>} : memref<1x2xf32, #tpu.memory_space<vmem>>, vector<1x2xf32>,
    %c0_109 = arith.constant 0 : index
    %c0_110 = arith.constant 0 : index
    %175 = vector.load %arg13[%c0_109, %c0_110] : memref<5x2xf32, #tpu.memory_space<vmem>>, vector<5x2xf32>
    tpu.vector_store %arg13[%c0_109, %c0_110], %161 {strides = array<i32>} : memref<5x2xf32, #tpu.memory_space<vmem>>, vector<5x2xf32>,
    %cst_111 = arith.constant 0.000000e+00 : f32
    %176 = vector.broadcast %cst_111 : f32 to vector<1x2xf32>
    %177 = arith.cmpf ogt, %156, %176 : vector<1x2xf32>
    %c0_112 = arith.constant 0 : index
    %c0_113 = arith.constant 0 : index
    %178 = vector.load %arg14[%c0_112, %c0_113] : memref<5x2xf32, #tpu.memory_space<vmem>>, vector<5x2xf32>
    %179 = vector.shape_cast %177 : vector<1x2xi1> to vector<1x2xi1>
    %180 = vector.broadcast %179 : vector<1x2xi1> to vector<5x2xi1>
    %181 = arith.select %180, %161, %178 : vector<5x2xi1>, vector<5x2xf32>
    %c0_114 = arith.constant 0 : index
    %c0_115 = arith.constant 0 : index
    %182 = vector.load %arg14[%c0_114, %c0_115] : memref<5x2xf32, #tpu.memory_space<vmem>>, vector<5x2xf32>
    tpu.vector_store %arg14[%c0_114, %c0_115], %181 {strides = array<i32>} : memref<5x2xf32, #tpu.memory_space<vmem>>, vector<5x2xf32>,
    %c0_116 = arith.constant 0 : index
    %c0_117 = arith.constant 0 : index
    %183 = vector.load %arg11[%c0_116, %c0_117] : memref<5x2xf32, #tpu.memory_space<vmem>>, vector<5x2xf32>
    %cst_118 = arith.constant dense<0xFF800000> : vector<2xf32>
    %184 = vector.multi_reduction <maximumf>, %183, %cst_118 [0] : vector<5x2xf32> to vector<2xf32>
    %185 = vector.shape_cast %184 : vector<2xf32> to vector<1x2xf32>
    %186 = vector.broadcast %185 : vector<1x2xf32> to vector<5x2xf32>
    %187 = arith.subf %183, %186 : vector<5x2xf32>
    %188 = math.exp %187 : vector<5x2xf32>
    %cst_119 = arith.constant dense<0.000000e+00> : vector<5x2xf32>
    %189 = tpu.matmul %1, %188, %cst_119 {dimension_numbers = #tpu.dot_dimension_numbers<[1], [0], [0], [1], [0, 0, 1, 1], [], []>} : vector<5x5xf32>, vector<5x2xf32>, vector<5x2xf32> -> vector<5x2xf32>
    %190 = math.log %189 : vector<5x2xf32>
    %191 = vector.broadcast %2 : vector<5x1xf32> to vector<5x2xf32>
    %192 = arith.addf %190, %191 : vector<5x2xf32>
    %193 = vector.broadcast %185 : vector<1x2xf32> to vector<5x2xf32>
    %194 = arith.addf %192, %193 : vector<5x2xf32>
    %195 = arith.addf %194, %155 : vector<5x2xf32>
    %cst_120 = arith.constant 0.000000e+00 : f32
    %196 = vector.broadcast %cst_120 : f32 to vector<1x2xf32>
    %197 = arith.cmpf ogt, %156, %196 : vector<1x2xf32>
    %198 = vector.shape_cast %197 : vector<1x2xi1> to vector<1x2xi1>
    %199 = vector.broadcast %198 : vector<1x2xi1> to vector<5x2xi1>
    %200 = arith.select %199, %195, %183 : vector<5x2xi1>, vector<5x2xf32>
    %c0_121 = arith.constant 0 : index
    %c0_122 = arith.constant 0 : index
    %201 = vector.load %arg11[%c0_121, %c0_122] : memref<5x2xf32, #tpu.memory_space<vmem>>, vector<5x2xf32>
    tpu.vector_store %arg11[%c0_121, %c0_122], %200 {strides = array<i32>} : memref<5x2xf32, #tpu.memory_space<vmem>>, vector<5x2xf32>,
    %c5 = arith.constant 5 : index
    %c0_123 = arith.constant 0 : index
    %c0_124 = arith.constant 0 : index
    %202 = vector.load %arg2[%c5, %c0_123, %c0_124] : memref<8x5x2xf32, #tpu.memory_space<vmem>>, vector<1x5x2xf32>
    %203 = vector.shape_cast %202 : vector<1x5x2xf32> to vector<5x2xf32>
    %c5_125 = arith.constant 5 : index
    %c0_126 = arith.constant 0 : index
    %204 = vector.load %arg4[%c5_125, %c0_126] : memref<8x2xf32, #tpu.memory_space<vmem>>, vector<1x2xf32>
    %c5_127 = arith.constant 5 : index
    %c0_128 = arith.constant 0 : index
    %205 = vector.load %arg3[%c5_127, %c0_128] : memref<8x2xi32, #tpu.memory_space<vmem>>, vector<1x2xi32>
    %206 = vector.broadcast %205 : vector<1x2xi32> to vector<5x2xi32>
    %207 = arith.cmpi eq, %206, %3 : vector<5x2xi32>
    %208 = arith.extui %207 : vector<5x2xi1> to vector<5x2xi32>
    %209 = arith.sitofp %208 : vector<5x2xi32> to vector<5x2xf32>
    %c0_129 = arith.constant 0 : index
    %c0_130 = arith.constant 0 : index
    %210 = vector.load %arg13[%c0_129, %c0_130] : memref<5x2xf32, #tpu.memory_space<vmem>>, vector<5x2xf32>
    %cst_131 = arith.constant dense<0.000000e+00> : vector<5x2xf32>
    %211 = tpu.matmul %0, %210, %cst_131 {dimension_numbers = #tpu.dot_dimension_numbers<[1], [0], [0], [1], [0, 0, 1, 1], [], []>} : vector<5x5xf32>, vector<5x2xf32>, vector<5x2xf32> -> vector<5x2xf32>
    %212 = arith.mulf %211, %209 : vector<5x2xf32>
    %cst_132 = arith.constant dense<0.000000e+00> : vector<2xf32>
    %213 = vector.multi_reduction <add>, %212, %cst_132 [0] : vector<5x2xf32> to vector<2xf32>
    %214 = vector.shape_cast %213 : vector<2xf32> to vector<1x2xf32>
    %215 = arith.mulf %209, %203 : vector<5x2xf32>
    %cst_133 = arith.constant dense<0.000000e+00> : vector<2xf32>
    %216 = vector.multi_reduction <add>, %215, %cst_133 [0] : vector<5x2xf32> to vector<2xf32>
    %217 = vector.shape_cast %216 : vector<2xf32> to vector<1x2xf32>
    %c0_134 = arith.constant 0 : index
    %c0_135 = arith.constant 0 : index
    %218 = vector.load %arg12[%c0_134, %c0_135] : memref<1x2xf32, #tpu.memory_space<vmem>>, vector<1x2xf32>
    %219 = arith.addf %214, %217 : vector<1x2xf32>
    %220 = arith.mulf %219, %204 : vector<1x2xf32>
    %221 = arith.addf %218, %220 : vector<1x2xf32>
    %c0_136 = arith.constant 0 : index
    %c0_137 = arith.constant 0 : index
    %222 = vector.load %arg12[%c0_136, %c0_137] : memref<1x2xf32, #tpu.memory_space<vmem>>, vector<1x2xf32>
    tpu.vector_store %arg12[%c0_136, %c0_137], %221 {strides = array<i32>} : memref<1x2xf32, #tpu.memory_space<vmem>>, vector<1x2xf32>,
    %c0_138 = arith.constant 0 : index
    %c0_139 = arith.constant 0 : index
    %223 = vector.load %arg13[%c0_138, %c0_139] : memref<5x2xf32, #tpu.memory_space<vmem>>, vector<5x2xf32>
    tpu.vector_store %arg13[%c0_138, %c0_139], %209 {strides = array<i32>} : memref<5x2xf32, #tpu.memory_space<vmem>>, vector<5x2xf32>,
    %cst_140 = arith.constant 0.000000e+00 : f32
    %224 = vector.broadcast %cst_140 : f32 to vector<1x2xf32>
    %225 = arith.cmpf ogt, %204, %224 : vector<1x2xf32>
    %c0_141 = arith.constant 0 : index
    %c0_142 = arith.constant 0 : index
    %226 = vector.load %arg14[%c0_141, %c0_142] : memref<5x2xf32, #tpu.memory_space<vmem>>, vector<5x2xf32>
    %227 = vector.shape_cast %225 : vector<1x2xi1> to vector<1x2xi1>
    %228 = vector.broadcast %227 : vector<1x2xi1> to vector<5x2xi1>
    %229 = arith.select %228, %209, %226 : vector<5x2xi1>, vector<5x2xf32>
    %c0_143 = arith.constant 0 : index
    %c0_144 = arith.constant 0 : index
    %230 = vector.load %arg14[%c0_143, %c0_144] : memref<5x2xf32, #tpu.memory_space<vmem>>, vector<5x2xf32>
    tpu.vector_store %arg14[%c0_143, %c0_144], %229 {strides = array<i32>} : memref<5x2xf32, #tpu.memory_space<vmem>>, vector<5x2xf32>,
    %c0_145 = arith.constant 0 : index
    %c0_146 = arith.constant 0 : index
    %231 = vector.load %arg11[%c0_145, %c0_146] : memref<5x2xf32, #tpu.memory_space<vmem>>, vector<5x2xf32>
    %cst_147 = arith.constant dense<0xFF800000> : vector<2xf32>
    %232 = vector.multi_reduction <maximumf>, %231, %cst_147 [0] : vector<5x2xf32> to vector<2xf32>
    %233 = vector.shape_cast %232 : vector<2xf32> to vector<1x2xf32>
    %234 = vector.broadcast %233 : vector<1x2xf32> to vector<5x2xf32>
    %235 = arith.subf %231, %234 : vector<5x2xf32>
    %236 = math.exp %235 : vector<5x2xf32>
    %cst_148 = arith.constant dense<0.000000e+00> : vector<5x2xf32>
    %237 = tpu.matmul %1, %236, %cst_148 {dimension_numbers = #tpu.dot_dimension_numbers<[1], [0], [0], [1], [0, 0, 1, 1], [], []>} : vector<5x5xf32>, vector<5x2xf32>, vector<5x2xf32> -> vector<5x2xf32>
    %238 = math.log %237 : vector<5x2xf32>
    %239 = vector.broadcast %2 : vector<5x1xf32> to vector<5x2xf32>
    %240 = arith.addf %238, %239 : vector<5x2xf32>
    %241 = vector.broadcast %233 : vector<1x2xf32> to vector<5x2xf32>
    %242 = arith.addf %240, %241 : vector<5x2xf32>
    %243 = arith.addf %242, %203 : vector<5x2xf32>
    %cst_149 = arith.constant 0.000000e+00 : f32
    %244 = vector.broadcast %cst_149 : f32 to vector<1x2xf32>
    %245 = arith.cmpf ogt, %204, %244 : vector<1x2xf32>
    %246 = vector.shape_cast %245 : vector<1x2xi1> to vector<1x2xi1>
    %247 = vector.broadcast %246 : vector<1x2xi1> to vector<5x2xi1>
    %248 = arith.select %247, %243, %231 : vector<5x2xi1>, vector<5x2xf32>
    %c0_150 = arith.constant 0 : index
    %c0_151 = arith.constant 0 : index
    %249 = vector.load %arg11[%c0_150, %c0_151] : memref<5x2xf32, #tpu.memory_space<vmem>>, vector<5x2xf32>
    tpu.vector_store %arg11[%c0_150, %c0_151], %248 {strides = array<i32>} : memref<5x2xf32, #tpu.memory_space<vmem>>, vector<5x2xf32>,
    %c6 = arith.constant 6 : index
    %c0_152 = arith.constant 0 : index
    %c0_153 = arith.constant 0 : index
    %250 = vector.load %arg2[%c6, %c0_152, %c0_153] : memref<8x5x2xf32, #tpu.memory_space<vmem>>, vector<1x5x2xf32>
    %251 = vector.shape_cast %250 : vector<1x5x2xf32> to vector<5x2xf32>
    %c6_154 = arith.constant 6 : index
    %c0_155 = arith.constant 0 : index
    %252 = vector.load %arg4[%c6_154, %c0_155] : memref<8x2xf32, #tpu.memory_space<vmem>>, vector<1x2xf32>
    %c6_156 = arith.constant 6 : index
    %c0_157 = arith.constant 0 : index
    %253 = vector.load %arg3[%c6_156, %c0_157] : memref<8x2xi32, #tpu.memory_space<vmem>>, vector<1x2xi32>
    %254 = vector.broadcast %253 : vector<1x2xi32> to vector<5x2xi32>
    %255 = arith.cmpi eq, %254, %3 : vector<5x2xi32>
    %256 = arith.extui %255 : vector<5x2xi1> to vector<5x2xi32>
    %257 = arith.sitofp %256 : vector<5x2xi32> to vector<5x2xf32>
    %c0_158 = arith.constant 0 : index
    %c0_159 = arith.constant 0 : index
    %258 = vector.load %arg13[%c0_158, %c0_159] : memref<5x2xf32, #tpu.memory_space<vmem>>, vector<5x2xf32>
    %cst_160 = arith.constant dense<0.000000e+00> : vector<5x2xf32>
    %259 = tpu.matmul %0, %258, %cst_160 {dimension_numbers = #tpu.dot_dimension_numbers<[1], [0], [0], [1], [0, 0, 1, 1], [], []>} : vector<5x5xf32>, vector<5x2xf32>, vector<5x2xf32> -> vector<5x2xf32>
    %260 = arith.mulf %259, %257 : vector<5x2xf32>
    %cst_161 = arith.constant dense<0.000000e+00> : vector<2xf32>
    %261 = vector.multi_reduction <add>, %260, %cst_161 [0] : vector<5x2xf32> to vector<2xf32>
    %262 = vector.shape_cast %261 : vector<2xf32> to vector<1x2xf32>
    %263 = arith.mulf %257, %251 : vector<5x2xf32>
    %cst_162 = arith.constant dense<0.000000e+00> : vector<2xf32>
    %264 = vector.multi_reduction <add>, %263, %cst_162 [0] : vector<5x2xf32> to vector<2xf32>
    %265 = vector.shape_cast %264 : vector<2xf32> to vector<1x2xf32>
    %c0_163 = arith.constant 0 : index
    %c0_164 = arith.constant 0 : index
    %266 = vector.load %arg12[%c0_163, %c0_164] : memref<1x2xf32, #tpu.memory_space<vmem>>, vector<1x2xf32>
    %267 = arith.addf %262, %265 : vector<1x2xf32>
    %268 = arith.mulf %267, %252 : vector<1x2xf32>
    %269 = arith.addf %266, %268 : vector<1x2xf32>
    %c0_165 = arith.constant 0 : index
    %c0_166 = arith.constant 0 : index
    %270 = vector.load %arg12[%c0_165, %c0_166] : memref<1x2xf32, #tpu.memory_space<vmem>>, vector<1x2xf32>
    tpu.vector_store %arg12[%c0_165, %c0_166], %269 {strides = array<i32>} : memref<1x2xf32, #tpu.memory_space<vmem>>, vector<1x2xf32>,
    %c0_167 = arith.constant 0 : index
    %c0_168 = arith.constant 0 : index
    %271 = vector.load %arg13[%c0_167, %c0_168] : memref<5x2xf32, #tpu.memory_space<vmem>>, vector<5x2xf32>
    tpu.vector_store %arg13[%c0_167, %c0_168], %257 {strides = array<i32>} : memref<5x2xf32, #tpu.memory_space<vmem>>, vector<5x2xf32>,
    %cst_169 = arith.constant 0.000000e+00 : f32
    %272 = vector.broadcast %cst_169 : f32 to vector<1x2xf32>
    %273 = arith.cmpf ogt, %252, %272 : vector<1x2xf32>
    %c0_170 = arith.constant 0 : index
    %c0_171 = arith.constant 0 : index
    %274 = vector.load %arg14[%c0_170, %c0_171] : memref<5x2xf32, #tpu.memory_space<vmem>>, vector<5x2xf32>
    %275 = vector.shape_cast %273 : vector<1x2xi1> to vector<1x2xi1>
    %276 = vector.broadcast %275 : vector<1x2xi1> to vector<5x2xi1>
    %277 = arith.select %276, %257, %274 : vector<5x2xi1>, vector<5x2xf32>
    %c0_172 = arith.constant 0 : index
    %c0_173 = arith.constant 0 : index
    %278 = vector.load %arg14[%c0_172, %c0_173] : memref<5x2xf32, #tpu.memory_space<vmem>>, vector<5x2xf32>
    tpu.vector_store %arg14[%c0_172, %c0_173], %277 {strides = array<i32>} : memref<5x2xf32, #tpu.memory_space<vmem>>, vector<5x2xf32>,
    %c0_174 = arith.constant 0 : index
    %c0_175 = arith.constant 0 : index
    %279 = vector.load %arg11[%c0_174, %c0_175] : memref<5x2xf32, #tpu.memory_space<vmem>>, vector<5x2xf32>
    %cst_176 = arith.constant dense<0xFF800000> : vector<2xf32>
    %280 = vector.multi_reduction <maximumf>, %279, %cst_176 [0] : vector<5x2xf32> to vector<2xf32>
    %281 = vector.shape_cast %280 : vector<2xf32> to vector<1x2xf32>
    %282 = vector.broadcast %281 : vector<1x2xf32> to vector<5x2xf32>
    %283 = arith.subf %279, %282 : vector<5x2xf32>
    %284 = math.exp %283 : vector<5x2xf32>
    %cst_177 = arith.constant dense<0.000000e+00> : vector<5x2xf32>
    %285 = tpu.matmul %1, %284, %cst_177 {dimension_numbers = #tpu.dot_dimension_numbers<[1], [0], [0], [1], [0, 0, 1, 1], [], []>} : vector<5x5xf32>, vector<5x2xf32>, vector<5x2xf32> -> vector<5x2xf32>
    %286 = math.log %285 : vector<5x2xf32>
    %287 = vector.broadcast %2 : vector<5x1xf32> to vector<5x2xf32>
    %288 = arith.addf %286, %287 : vector<5x2xf32>
    %289 = vector.broadcast %281 : vector<1x2xf32> to vector<5x2xf32>
    %290 = arith.addf %288, %289 : vector<5x2xf32>
    %291 = arith.addf %290, %251 : vector<5x2xf32>
    %cst_178 = arith.constant 0.000000e+00 : f32
    %292 = vector.broadcast %cst_178 : f32 to vector<1x2xf32>
    %293 = arith.cmpf ogt, %252, %292 : vector<1x2xf32>
    %294 = vector.shape_cast %293 : vector<1x2xi1> to vector<1x2xi1>
    %295 = vector.broadcast %294 : vector<1x2xi1> to vector<5x2xi1>
    %296 = arith.select %295, %291, %279 : vector<5x2xi1>, vector<5x2xf32>
    %c0_179 = arith.constant 0 : index
    %c0_180 = arith.constant 0 : index
    %297 = vector.load %arg11[%c0_179, %c0_180] : memref<5x2xf32, #tpu.memory_space<vmem>>, vector<5x2xf32>
    tpu.vector_store %arg11[%c0_179, %c0_180], %296 {strides = array<i32>} : memref<5x2xf32, #tpu.memory_space<vmem>>, vector<5x2xf32>,
    %c7 = arith.constant 7 : index
    %c0_181 = arith.constant 0 : index
    %c0_182 = arith.constant 0 : index
    %298 = vector.load %arg2[%c7, %c0_181, %c0_182] : memref<8x5x2xf32, #tpu.memory_space<vmem>>, vector<1x5x2xf32>
    %299 = vector.shape_cast %298 : vector<1x5x2xf32> to vector<5x2xf32>
    %c7_183 = arith.constant 7 : index
    %c0_184 = arith.constant 0 : index
    %300 = vector.load %arg4[%c7_183, %c0_184] : memref<8x2xf32, #tpu.memory_space<vmem>>, vector<1x2xf32>
    %c7_185 = arith.constant 7 : index
    %c0_186 = arith.constant 0 : index
    %301 = vector.load %arg3[%c7_185, %c0_186] : memref<8x2xi32, #tpu.memory_space<vmem>>, vector<1x2xi32>
    %302 = vector.broadcast %301 : vector<1x2xi32> to vector<5x2xi32>
    %303 = arith.cmpi eq, %302, %3 : vector<5x2xi32>
    %304 = arith.extui %303 : vector<5x2xi1> to vector<5x2xi32>
    %305 = arith.sitofp %304 : vector<5x2xi32> to vector<5x2xf32>
    %c0_187 = arith.constant 0 : index
    %c0_188 = arith.constant 0 : index
    %306 = vector.load %arg13[%c0_187, %c0_188] : memref<5x2xf32, #tpu.memory_space<vmem>>, vector<5x2xf32>
    %cst_189 = arith.constant dense<0.000000e+00> : vector<5x2xf32>
    %307 = tpu.matmul %0, %306, %cst_189 {dimension_numbers = #tpu.dot_dimension_numbers<[1], [0], [0], [1], [0, 0, 1, 1], [], []>} : vector<5x5xf32>, vector<5x2xf32>, vector<5x2xf32> -> vector<5x2xf32>
    %308 = arith.mulf %307, %305 : vector<5x2xf32>
    %cst_190 = arith.constant dense<0.000000e+00> : vector<2xf32>
    %309 = vector.multi_reduction <add>, %308, %cst_190 [0] : vector<5x2xf32> to vector<2xf32>
    %310 = vector.shape_cast %309 : vector<2xf32> to vector<1x2xf32>
    %311 = arith.mulf %305, %299 : vector<5x2xf32>
    %cst_191 = arith.constant dense<0.000000e+00> : vector<2xf32>
    %312 = vector.multi_reduction <add>, %311, %cst_191 [0] : vector<5x2xf32> to vector<2xf32>
    %313 = vector.shape_cast %312 : vector<2xf32> to vector<1x2xf32>
    %c0_192 = arith.constant 0 : index
    %c0_193 = arith.constant 0 : index
    %314 = vector.load %arg12[%c0_192, %c0_193] : memref<1x2xf32, #tpu.memory_space<vmem>>, vector<1x2xf32>
    %315 = arith.addf %310, %313 : vector<1x2xf32>
    %316 = arith.mulf %315, %300 : vector<1x2xf32>
    %317 = arith.addf %314, %316 : vector<1x2xf32>
    %c0_194 = arith.constant 0 : index
    %c0_195 = arith.constant 0 : index
    %318 = vector.load %arg12[%c0_194, %c0_195] : memref<1x2xf32, #tpu.memory_space<vmem>>, vector<1x2xf32>
    tpu.vector_store %arg12[%c0_194, %c0_195], %317 {strides = array<i32>} : memref<1x2xf32, #tpu.memory_space<vmem>>, vector<1x2xf32>,
    %c0_196 = arith.constant 0 : index
    %c0_197 = arith.constant 0 : index
    %319 = vector.load %arg13[%c0_196, %c0_197] : memref<5x2xf32, #tpu.memory_space<vmem>>, vector<5x2xf32>
    tpu.vector_store %arg13[%c0_196, %c0_197], %305 {strides = array<i32>} : memref<5x2xf32, #tpu.memory_space<vmem>>, vector<5x2xf32>,
    %cst_198 = arith.constant 0.000000e+00 : f32
    %320 = vector.broadcast %cst_198 : f32 to vector<1x2xf32>
    %321 = arith.cmpf ogt, %300, %320 : vector<1x2xf32>
    %c0_199 = arith.constant 0 : index
    %c0_200 = arith.constant 0 : index
    %322 = vector.load %arg14[%c0_199, %c0_200] : memref<5x2xf32, #tpu.memory_space<vmem>>, vector<5x2xf32>
    %323 = vector.shape_cast %321 : vector<1x2xi1> to vector<1x2xi1>
    %324 = vector.broadcast %323 : vector<1x2xi1> to vector<5x2xi1>
    %325 = arith.select %324, %305, %322 : vector<5x2xi1>, vector<5x2xf32>
    %c0_201 = arith.constant 0 : index
    %c0_202 = arith.constant 0 : index
    %326 = vector.load %arg14[%c0_201, %c0_202] : memref<5x2xf32, #tpu.memory_space<vmem>>, vector<5x2xf32>
    tpu.vector_store %arg14[%c0_201, %c0_202], %325 {strides = array<i32>} : memref<5x2xf32, #tpu.memory_space<vmem>>, vector<5x2xf32>,
    %c0_203 = arith.constant 0 : index
    %c0_204 = arith.constant 0 : index
    %327 = vector.load %arg11[%c0_203, %c0_204] : memref<5x2xf32, #tpu.memory_space<vmem>>, vector<5x2xf32>
    %cst_205 = arith.constant dense<0xFF800000> : vector<2xf32>
    %328 = vector.multi_reduction <maximumf>, %327, %cst_205 [0] : vector<5x2xf32> to vector<2xf32>
    %329 = vector.shape_cast %328 : vector<2xf32> to vector<1x2xf32>
    %330 = vector.broadcast %329 : vector<1x2xf32> to vector<5x2xf32>
    %331 = arith.subf %327, %330 : vector<5x2xf32>
    %332 = math.exp %331 : vector<5x2xf32>
    %cst_206 = arith.constant dense<0.000000e+00> : vector<5x2xf32>
    %333 = tpu.matmul %1, %332, %cst_206 {dimension_numbers = #tpu.dot_dimension_numbers<[1], [0], [0], [1], [0, 0, 1, 1], [], []>} : vector<5x5xf32>, vector<5x2xf32>, vector<5x2xf32> -> vector<5x2xf32>
    %334 = math.log %333 : vector<5x2xf32>
    %335 = vector.broadcast %2 : vector<5x1xf32> to vector<5x2xf32>
    %336 = arith.addf %334, %335 : vector<5x2xf32>
    %337 = vector.broadcast %329 : vector<1x2xf32> to vector<5x2xf32>
    %338 = arith.addf %336, %337 : vector<5x2xf32>
    %339 = arith.addf %338, %299 : vector<5x2xf32>
    %cst_207 = arith.constant 0.000000e+00 : f32
    %340 = vector.broadcast %cst_207 : f32 to vector<1x2xf32>
    %341 = arith.cmpf ogt, %300, %340 : vector<1x2xf32>
    %342 = vector.shape_cast %341 : vector<1x2xi1> to vector<1x2xi1>
    %343 = vector.broadcast %342 : vector<1x2xi1> to vector<5x2xi1>
    %344 = arith.select %343, %339, %327 : vector<5x2xi1>, vector<5x2xf32>
    %c0_208 = arith.constant 0 : index
    %c0_209 = arith.constant 0 : index
    %345 = vector.load %arg11[%c0_208, %c0_209] : memref<5x2xf32, #tpu.memory_space<vmem>>, vector<5x2xf32>
    tpu.vector_store %arg11[%c0_208, %c0_209], %344 {strides = array<i32>} : memref<5x2xf32, #tpu.memory_space<vmem>>, vector<5x2xf32>,
    %c0_i32_210 = arith.constant 0 : i32
    %346 = arith.cmpi eq, %arg1, %c0_i32_210 : i32
    %347 = arith.extui %346 : i1 to i32
    %c0_i32_211 = arith.constant 0 : i32
    %348 = arith.cmpi ne, %347, %c0_i32_211 : i32
    scf.if %348 {
      %c0_212 = arith.constant 0 : index
      %c0_213 = arith.constant 0 : index
      %349 = vector.load %arg9[%c0_212, %c0_213] : memref<5x1xf32, #tpu.memory_space<vmem>>, vector<5x1xf32>
      %c0_214 = arith.constant 0 : index
      %c0_215 = arith.constant 0 : index
      %350 = vector.load %arg12[%c0_214, %c0_215] : memref<1x2xf32, #tpu.memory_space<vmem>>, vector<1x2xf32>
      %c0_216 = arith.constant 0 : index
      %c0_217 = arith.constant 0 : index
      %351 = vector.load %arg14[%c0_216, %c0_217] : memref<5x2xf32, #tpu.memory_space<vmem>>, vector<5x2xf32>
      %352 = vector.broadcast %349 : vector<5x1xf32> to vector<5x2xf32>
      %353 = arith.mulf %351, %352 : vector<5x2xf32>
      %cst_218 = arith.constant dense<0.000000e+00> : vector<2xf32>
      %354 = vector.multi_reduction <add>, %353, %cst_218 [0] : vector<5x2xf32> to vector<2xf32>
      %355 = vector.shape_cast %354 : vector<2xf32> to vector<1x2xf32>
      %356 = arith.addf %350, %355 : vector<1x2xf32>
      %c0_219 = arith.constant 0 : index
      %c0_220 = arith.constant 0 : index
      %357 = vector.load %arg11[%c0_219, %c0_220] : memref<5x2xf32, #tpu.memory_space<vmem>>, vector<5x2xf32>
      %358 = vector.broadcast %349 : vector<5x1xf32> to vector<5x2xf32>
      %359 = arith.addf %357, %358 : vector<5x2xf32>
      %cst_221 = arith.constant dense<0xFF800000> : vector<2xf32>
      %360 = vector.multi_reduction <maximumf>, %359, %cst_221 [0] : vector<5x2xf32> to vector<2xf32>
      %361 = vector.shape_cast %360 : vector<2xf32> to vector<1x2xf32>
      %362 = vector.broadcast %361 : vector<1x2xf32> to vector<5x2xf32>
      %363 = arith.subf %359, %362 : vector<5x2xf32>
      %364 = math.exp %363 : vector<5x2xf32>
      %cst_222 = arith.constant dense<0.000000e+00> : vector<2xf32>
      %365 = vector.multi_reduction <add>, %364, %cst_222 [0] : vector<5x2xf32> to vector<2xf32>
      %366 = vector.shape_cast %365 : vector<2xf32> to vector<1x2xf32>
      %367 = math.log %366 : vector<1x2xf32>
      %368 = arith.addf %367, %361 : vector<1x2xf32>
      %369 = arith.subf %368, %356 : vector<1x2xf32>
      %c0_223 = arith.constant 0 : index
      %c0_224 = arith.constant 0 : index
      %370 = vector.load %arg10[%c0_223, %c0_224] : memref<1x2xf32, #tpu.memory_space<vmem>>, vector<1x2xf32>
      tpu.vector_store %arg10[%c0_223, %c0_224], %369 {strides = array<i32>} : memref<1x2xf32, #tpu.memory_space<vmem>>, vector<1x2xf32>,
    } else {
    }
    return
  }
  func.func @transform_0(%arg0: i32, %arg1: i32) -> (i32, i32, i32) {
    %c0_i32 = arith.constant 0 : i32
    %c0_i32_0 = arith.constant 0 : i32
    return %arg1, %c0_i32, %arg0 : i32, i32, i32
  }
  func.func @transform_1(%arg0: i32, %arg1: i32) -> (i32, i32) {
    %c0_i32 = arith.constant 0 : i32
    return %arg1, %arg0 : i32, i32
  }
  func.func @transform_2(%arg0: i32, %arg1: i32) -> (i32, i32) {
    %c0_i32 = arith.constant 0 : i32
    return %arg1, %arg0 : i32, i32
  }
  func.func @transform_3(%arg0: i32, %arg1: i32) -> (i32, i32) {
    %c0_i32 = arith.constant 0 : i32
    %c0_i32_0 = arith.constant 0 : i32
    %c0_i32_1 = arith.constant 0 : i32
    return %c0_i32, %c0_i32_0 : i32, i32
  }
  func.func @transform_4(%arg0: i32, %arg1: i32) -> (i32, i32) {
    %c0_i32 = arith.constant 0 : i32
    %c0_i32_0 = arith.constant 0 : i32
    %c0_i32_1 = arith.constant 0 : i32
    return %c0_i32, %c0_i32_0 : i32, i32
  }
  func.func @transform_5(%arg0: i32, %arg1: i32) -> (i32, i32) {
    %c0_i32 = arith.constant 0 : i32
    %c0_i32_0 = arith.constant 0 : i32
    %c0_i32_1 = arith.constant 0 : i32
    return %c0_i32, %c0_i32_0 : i32, i32
  }
  func.func @transform_6(%arg0: i32, %arg1: i32) -> (i32, i32) {
    %c0_i32 = arith.constant 0 : i32
    %c0_i32_0 = arith.constant 0 : i32
    %c0_i32_1 = arith.constant 0 : i32
    return %c0_i32, %c0_i32_0 : i32, i32
  }
  func.func @transform_7(%arg0: i32, %arg1: i32) -> (i32, i32) {
    %c0_i32 = arith.constant 0 : i32
    %c0_i32_0 = arith.constant 0 : i32
    %c0_i32_1 = arith.constant 0 : i32
    return %c0_i32, %c0_i32_0 : i32, i32
  }
  func.func @transform_8(%arg0: i32, %arg1: i32) -> (i32, i32) {
    %c0_i32 = arith.constant 0 : i32
    %c0_i32_0 = arith.constant 0 : i32
    return %c0_i32, %arg0 : i32, i32
  }
}

</mosaic_0001>

<llo_original>
// kernel: tpu_custom_call.1
$region0: #{tpu_custom_call.1}
  #allocation0 [shape = 'u32[]', space=smem, size = 0x4, offset = 0x4, fixed_abs, tag = 'smem constant byte address 0x4 - core index']
  #allocation1 [shape = 'u32[72,128]{1,0:T(1,128)}', space=vmem, size = 0x9000, scoped, tag = 'internal scratch']
  #allocation2 [shape = 'f32[5,2]{1,0:T(8,128)}', space=vmem, size = 0x1000, scoped, tag = 'scratch operand']
  #allocation3 [shape = 'f32[1,2]{1,0:T(1,128)}', space=vmem, size = 0x200, scoped, tag = 'scratch operand']
  #allocation4 [shape = 'f32[5,2]{1,0:T(8,128)}', space=vmem, size = 0x1000, scoped, tag = 'scratch operand']
  #allocation5 [shape = 'f32[5,2]{1,0:T(8,128)}', space=vmem, size = 0x1000, scoped, tag = 'scratch operand']
  %s0 = inlined_call_operand.vmem [shape: f32[8,5,2], index: 0, kind: input, shape index: {}]
  %s1 = inlined_call_operand.vmem [shape: s32[8,2], index: 1, kind: input, shape index: {}]
  %s2 = inlined_call_operand.vmem [shape: f32[8,2], index: 2, kind: input, shape index: {}]
  %s3 = inlined_call_operand.vmem [shape: f32[5,5], index: 3, kind: input, shape index: {}]
  %s4 = inlined_call_operand.vmem [shape: f32[5,5], index: 4, kind: input, shape index: {}]
  %s5 = inlined_call_operand.vmem [shape: f32[5,1], index: 5, kind: input, shape index: {}]
  %s6 = inlined_call_operand.vmem [shape: f32[5,1], index: 6, kind: input, shape index: {}]
  %s7 = inlined_call_operand.vmem [shape: f32[5,1], index: 7, kind: input, shape index: {}]
  %s8 = inlined_call_operand.hbm [shape: f32[1,2], index: 8, kind: output, shape index: {}]
  %s9 = sld [smem:[#allocation0]]
  $region54: #{tpu_custom_call.1} parent=0
    _
  %s11 = ssub.s32 1, %s9
  %s12 = scalar_select 0, %s11, %s9
  $region1: #{tpu_custom_call.1} parent=0
    #allocation6 [shape = 'u8[512]{0}', space=vmem, size = 0x400, scoped, tag = 'output window, operand 0, single buffered']
    #allocation7 [shape = 's32[1]{0}', space=sflag, size = 0x4, scoped, tag = 'scoped memory for tpu_custom_call.1']
    %13 = vsyncpa [#allocation7], 0
    // Predicated region
    $region2: #{tpu_custom_call.1} parent=1 // pred_check
      _
    $region3: #{tpu_custom_call.1} parent=1 // pred_check_branch
      %15 = sbr.rel (0) target = $region5
    $region4: #{tpu_custom_call.1} parent=1 // pred_region
      _
    $region5: #{tpu_custom_call.1} parent=1 // pred_fallthru
      _
    // Predicated region
    $region6: #{tpu_custom_call.1} parent=1 // pred_check
      _
    $region7: #{tpu_custom_call.1} parent=1 // pred_check_branch
      %17 = sbr.rel (0) target = $region9
    $region8: #{tpu_custom_call.1} parent=1 // pred_region
      _
    $region9: #{tpu_custom_call.1} parent=1 // pred_fallthru
      _
    // Predicated region
    $region10: #{tpu_custom_call.1} parent=1 // pred_check
      _
    $region11: #{tpu_custom_call.1} parent=1 // pred_check_branch
      %19 = sbr.rel (0) target = $region13
    $region12: #{tpu_custom_call.1} parent=1 // pred_region
      _
    $region13: #{tpu_custom_call.1} parent=1 // pred_fallthru
      _
    // Predicated region
    $region14: #{tpu_custom_call.1} parent=1 // pred_check
      _
    $region15: #{tpu_custom_call.1} parent=1 // pred_check_branch
      %21 = sbr.rel (0) target = $region17
    $region16: #{tpu_custom_call.1} parent=1 // pred_region
      _
    $region17: #{tpu_custom_call.1} parent=1 // pred_fallthru
      _
    // Predicated region
    $region18: #{tpu_custom_call.1} parent=1 // pred_check
      _
    $region19: #{tpu_custom_call.1} parent=1 // pred_check_branch
      %23 = sbr.rel (0) target = $region21
    $region20: #{tpu_custom_call.1} parent=1 // pred_region
      _
    $region21: #{tpu_custom_call.1} parent=1 // pred_fallthru
      _
    // Predicated region
    $region22: #{tpu_custom_call.1} parent=1 // pred_check
      _
    $region23: #{tpu_custom_call.1} parent=1 // pred_check_branch
      %25 = sbr.rel (0) target = $region25
    $region24: #{tpu_custom_call.1} parent=1 // pred_region
      _
    $region25: #{tpu_custom_call.1} parent=1 // pred_fallthru
      _
    // Predicated region
    $region26: #{tpu_custom_call.1} parent=1 // pred_check
      _
    $region27: #{tpu_custom_call.1} parent=1 // pred_check_branch
      %27 = sbr.rel (0) target = $region29
    $region28: #{tpu_custom_call.1} parent=1 // pred_region
      _
    $region29: #{tpu_custom_call.1} parent=1 // pred_fallthru
      _
    // Predicated region
    $region30: #{tpu_custom_call.1} parent=1 // pred_check
      _
    $region31: #{tpu_custom_call.1} parent=1 // pred_check_branch
      %29 = sbr.rel (0) target = $region33
    $region32: #{tpu_custom_call.1} parent=1 // pred_region
      _
    $region33: #{tpu_custom_call.1} parent=1 // pred_fallthru
      _
    %v30 = vld [vmem:[%s3] sm:$0x1f]
    %v31 = vld [vmem:[%s4] sm:$0x1f]
    %v32 = vld [vmem:[%s5] sm:$0x1f]
    %v33 = vlaneseq
    %v34 = vshrl.u32 %v33, 7
    %p35 = scmp.eq.s32.totalorder 0, 0
    // Predicated region
    $region34: #{tpu_custom_call.1} parent=1 // pred_check
      %p36 = pneg %p35
    $region35: #{tpu_custom_call.1} parent=1 // pred_check_branch
      %38 = sbr.rel (%p36) target = $region37
    $region36: #{tpu_custom_call.1} parent=1 // pred_region
      %v39 = vld [vmem:[%s0] sm:$0x1f]
      %v40 = vld [vmem:[%s1] sm:$0x1]
      %v41 = vperm.slane %v40, 0
      %vm42 = vcmp.eq.s32.totalorder %v41, %v34
      %v43 = vsel %vm42, 1, 0
      %v44 = vcvt.s32.f32 %v43
      %v45 = vld [vmem:[%s6] sm:$0x1f]
      %47 = vset.pattern.permute.xlu0 0
      %48 = vperm.xlu0 %47, %v45
      %v49 = vpop.permute.xlu0 %48
      %v51 = vadd.f32 %v49, %v39
      %vm52 = vcmask 12288
      %53 = vst.msk [vmem:[#allocation2] sm:$0x1f] %vm52, %v51
      %v54 = vmul.f32 %v44, %v51
      %v55 = vsel %vm52, %v54, 0.0
      %v56 = vrot.slane %v55, 4
      %v57 = vadd.f32 %v55, %v56
      %v58 = vrot.slane %v57, 2
      %v59 = vadd.f32 %v57, %v58
      %v60 = vrot.slane %v59, 1
      %v61 = vadd.f32 %v59, %v60
      %vm62 = vcmask 8192
      %63 = vst.msk [vmem:[#allocation3] sm:$0x1] %vm62, %v61
      %64 = vst.msk [vmem:[#allocation4] sm:$0x1f] %vm52, %v44
      %65 = vst.msk [vmem:[#allocation5] sm:$0x1f] %vm52, %v44
    $region37: #{tpu_custom_call.1} parent=1 // pred_fallthru
      _
    %p66 = scmp.gt.s32.totalorder 0, 0
    // Predicated region
    $region38: #{tpu_custom_call.1} parent=1 // pred_check
      %p67 = pneg %p66
    $region39: #{tpu_custom_call.1} parent=1 // pred_check_branch
      %69 = sbr.rel (%p67) target = $region41
    $region40: #{tpu_custom_call.1} parent=1 // pred_region
      %v70 = vld [vmem:[%s0] sm:$0x1f]
      %v71 = vld [vmem:[%s2] sm:$0x1]
      %v72 = vld [vmem:[%s1] sm:$0x1]
      %v73 = vperm.slane %v72, 0
      %vm74 = vcmp.eq.s32.totalorder %v73, %v34
      %v75 = vsel %vm74, 1, 0
      %v76 = vcvt.s32.f32 %v75
      %v77 = vld [vmem:[#allocation4] sm:$0x1f]
      %vm78 = vcmask 39936
      %v80 = vsel %vm78, %v30, 0
      %vm82 = vcmask 1044480
      %v84 = vsel %vm82, %v77, 0
      %86 = vmatpush.msra.mxu0 0.0
      %87 = vmatpush.msra.mxu0 0.0
      %88 = vmatpush.msra.mxu0 0.0
      %89 = vmatpush.msra.mxu0 0.0
      %90 = vmatpush.msra.mxu0 0.0
      %91 = vmatpush.msra.mxu0 0.0
      %92 = vmatpush.msra.mxu0 0.0
      %93 = vmatpush.msra.mxu0 0.0
      %94 = vmatpush.msra.mxu0 0.0
      %95 = vmatpush.msra.mxu0 0.0
      %96 = vmatpush.msra.mxu0 0.0
      %97 = vmatpush.msra.mxu0 0.0
      %98 = vmatpush.msra.mxu0 0.0
      %99 = vmatpush.msra.mxu0 0.0
      %100 = vmatpush.msra.mxu0 0.0
      %101 = vmatpush.msra.mxu0 %v84
      %102 = vmatmul.f32.gmra.mxu0 %v80
      %v103 = vpop.f32.mrf.mxu0
      %v104 = vadd.f32 0.0, %v103
      %105 = vdwg.mxu0
      %v106 = vmul.f32 %v104, %v76
      %vm107 = vcmask 12288
      %v108 = vsel %vm107, %v106, 0.0
      %v109 = vrot.slane %v108, 4
      %v110 = vadd.f32 %v108, %v109
      %v111 = vrot.slane %v110, 2
      %v112 = vadd.f32 %v110, %v111
      %v113 = vrot.slane %v112, 1
      %v114 = vadd.f32 %v112, %v113
      %v115 = vmul.f32 %v76, %v70
      %v116 = vsel %vm107, %v115, 0.0
      %v117 = vrot.slane %v116, 4
      %v118 = vadd.f32 %v116, %v117
      %v119 = vrot.slane %v118, 2
      %v120 = vadd.f32 %v118, %v119
      %v121 = vrot.slane %v120, 1
      %v122 = vadd.f32 %v120, %v121
      %v123 = vld [vmem:[#allocation3] sm:$0x1]
      %v124 = vadd.f32 %v114, %v122
      %v125 = vmul.f32 %v124, %v71
      %v126 = vadd.f32 %v123, %v125
      %vm127 = vcmask 8192
      %128 = vst.msk [vmem:[#allocation3] sm:$0x1] %vm127, %v126
      %129 = vst.msk [vmem:[#allocation4] sm:$0x1f] %vm107, %v76
      %vm130 = vcmp.gt.f32.partialorder %v71, 0.0
      %v131 = vld [vmem:[#allocation5] sm:$0x1f]
      %v132 = vsel %vm130, 1, 0
      %v133 = vperm.slane %v132, 0
      %vm134 = vcmp.eq.s32.totalorder %v133, 1
      %v135 = vsel %vm134, %v76, %v131
      %136 = vst.msk [vmem:[#allocation5] sm:$0x1f] %vm107, %v135
      %v137 = vld [vmem:[#allocation2] sm:$0x1f]
      %v138 = vsel %vm107, %v137, -inf
      %v139 = vrot.slane %v138, 4
      %v140 = vmax.f32 %v138, %v139
      %v141 = vrot.slane %v140, 2
      %v142 = vmax.f32 %v140, %v141
      %v143 = vrot.slane %v142, 1
      %v144 = vmax.f32 %v142, %v143
      %v145 = vsub.f32 %v137, %v144
      %v146 = vmul.f32 %v145, 1.442695
      %v147 = vpow.pop %v146
      %v149 = vsel %vm78, %v31, 0
      %v152 = vsel %vm82, %v147, 0
      %154 = vmatpush.msra.mxu0 0.0
      %155 = vmatpush.msra.mxu0 0.0
      %156 = vmatpush.msra.mxu0 0.0
      %157 = vmatpush.msra.mxu0 0.0
      %158 = vmatpush.msra.mxu0 0.0
      %159 = vmatpush.msra.mxu0 0.0
      %160 = vmatpush.msra.mxu0 0.0
      %161 = vmatpush.msra.mxu0 0.0
      %162 = vmatpush.msra.mxu0 0.0
      %163 = vmatpush.msra.mxu0 0.0
      %164 = vmatpush.msra.mxu0 0.0
      %165 = vmatpush.msra.mxu0 0.0
      %166 = vmatpush.msra.mxu0 0.0
      %167 = vmatpush.msra.mxu0 0.0
      %168 = vmatpush.msra.mxu0 0.0
      %169 = vmatpush.msra.mxu0 %v152
      %170 = vmatmul.f32.gmra.mxu0 %v149
      %v171 = vpop.f32.mrf.mxu0
      %v172 = vadd.f32 0.0, %v171
      %173 = vdwg.mxu0
      %v174 = vlog2.pop %v172
      %v175 = vmul.f32 %v174, 0.6931472
      %177 = vset.pattern.permute.xlu0 0
      %178 = vperm.xlu0 %177, %v32
      %v179 = vpop.permute.xlu0 %178
      %v181 = vadd.f32 %v175, %v179
      %v182 = vadd.f32 %v181, %v144
      %v183 = vadd.f32 %v182, %v70
      %v184 = vsel %vm134, %v183, %v137
      %185 = vst.msk [vmem:[#allocation2] sm:$0x1f] %vm107, %v184
    $region41: #{tpu_custom_call.1} parent=1 // pred_fallthru
      _
    %s186 = scalar_lea.vmem %s0, 8
    %v187 = vld [vmem:[%s186] sm:$0x1f]
    %v188 = vld [vmem:[%s2 + $0x1] sm:$0x1]
    %v189 = vld [vmem:[%s1 + $0x1] sm:$0x1]
    %v190 = vperm.slane %v189, 0
    %vm191 = vcmp.eq.s32.totalorder %v190, %v34
    %v192 = vsel %vm191, 1, 0
    %v193 = vcvt.s32.f32 %v192
    %v194 = vld [vmem:[#allocation4] sm:$0x1f]
    %vm195 = vcmask 39936
    %v197 = vsel %vm195, %v30, 0
    %vm199 = vcmask 1044480
    %v201 = vsel %vm199, %v194, 0
    %203 = vmatpush.msra.mxu0 0.0
    %204 = vmatpush.msra.mxu0 0.0
    %205 = vmatpush.msra.mxu0 0.0
    %206 = vmatpush.msra.mxu0 0.0
    %207 = vmatpush.msra.mxu0 0.0
    %208 = vmatpush.msra.mxu0 0.0
    %209 = vmatpush.msra.mxu0 0.0
    %210 = vmatpush.msra.mxu0 0.0
    %211 = vmatpush.msra.mxu0 0.0
    %212 = vmatpush.msra.mxu0 0.0
    %213 = vmatpush.msra.mxu0 0.0
    %214 = vmatpush.msra.mxu0 0.0
    %215 = vmatpush.msra.mxu0 0.0
    %216 = vmatpush.msra.mxu0 0.0
    %217 = vmatpush.msra.mxu0 0.0
    %218 = vmatpush.msra.mxu0 %v201
    %219 = vmatmul.f32.gmra.mxu0 %v197
    %v220 = vpop.f32.mrf.mxu0
    %v221 = vadd.f32 0.0, %v220
    %222 = vdwg.mxu0
    %v223 = vmul.f32 %v221, %v193
    %vm224 = vcmask 12288
    %v225 = vsel %vm224, %v223, 0.0
    %v226 = vrot.slane %v225, 4
    %v227 = vadd.f32 %v225, %v226
    %v228 = vrot.slane %v227, 2
    %v229 = vadd.f32 %v227, %v228
    %v230 = vrot.slane %v229, 1
    %v231 = vadd.f32 %v229, %v230
    %v232 = vmul.f32 %v193, %v187
    %v233 = vsel %vm224, %v232, 0.0
    %v234 = vrot.slane %v233, 4
    %v235 = vadd.f32 %v233, %v234
    %v236 = vrot.slane %v235, 2
    %v237 = vadd.f32 %v235, %v236
    %v238 = vrot.slane %v237, 1
    %v239 = vadd.f32 %v237, %v238
    %v240 = vld [vmem:[#allocation3] sm:$0x1]
    %v241 = vadd.f32 %v231, %v239
    %v242 = vmul.f32 %v241, %v188
    %v243 = vadd.f32 %v240, %v242
    %vm244 = vcmask 8192
    %245 = vst.msk [vmem:[#allocation3] sm:$0x1] %vm244, %v243
    %246 = vst.msk [vmem:[#allocation4] sm:$0x1f] %vm224, %v193
    %vm247 = vcmp.gt.f32.partialorder %v188, 0.0
    %v248 = vld [vmem:[#allocation5] sm:$0x1f]
    %v249 = vsel %vm247, 1, 0
    %v250 = vperm.slane %v249, 0
    %vm251 = vcmp.eq.s32.totalorder %v250, 1
    %v252 = vsel %vm251, %v193, %v248
    %253 = vst.msk [vmem:[#allocation5] sm:$0x1f] %vm224, %v252
    %v254 = vld [vmem:[#allocation2] sm:$0x1f]
    %v255 = vsel %vm224, %v254, -inf
    %v256 = vrot.slane %v255, 4
    %v257 = vmax.f32 %v255, %v256
    %v258 = vrot.slane %v257, 2
    %v259 = vmax.f32 %v257, %v258
    %v260 = vrot.slane %v259, 1
    %v261 = vmax.f32 %v259, %v260
    %v262 = vsub.f32 %v254, %v261
    %v263 = vmul.f32 %v262, 1.442695
    %v264 = vpow.pop %v263
    %v266 = vsel %vm195, %v31, 0
    %v269 = vsel %vm199, %v264, 0
    %271 = vmatpush.msra.mxu0 0.0
    %272 = vmatpush.msra.mxu0 0.0
    %273 = vmatpush.msra.mxu0 0.0
    %274 = vmatpush.msra.mxu0 0.0
    %275 = vmatpush.msra.mxu0 0.0
    %276 = vmatpush.msra.mxu0 0.0
    %277 = vmatpush.msra.mxu0 0.0
    %278 = vmatpush.msra.mxu0 0.0
    %279 = vmatpush.msra.mxu0 0.0
    %280 = vmatpush.msra.mxu0 0.0
    %281 = vmatpush.msra.mxu0 0.0
    %282 = vmatpush.msra.mxu0 0.0
    %283 = vmatpush.msra.mxu0 0.0
    %284 = vmatpush.msra.mxu0 0.0
    %285 = vmatpush.msra.mxu0 0.0
    %286 = vmatpush.msra.mxu0 %v269
    %287 = vmatmul.f32.gmra.mxu0 %v266
    %v288 = vpop.f32.mrf.mxu0
    %v289 = vadd.f32 0.0, %v288
    %290 = vdwg.mxu0
    %v291 = vlog2.pop %v289
    %v292 = vmul.f32 %v291, 0.6931472
    %294 = vset.pattern.permute.xlu0 0
    %295 = vperm.xlu0 %294, %v32
    %v296 = vpop.permute.xlu0 %295
    %v298 = vadd.f32 %v292, %v296
    %v299 = vadd.f32 %v298, %v261
    %v300 = vadd.f32 %v299, %v187
    %v301 = vsel %vm251, %v300, %v254
    %302 = vst.msk [vmem:[#allocation2] sm:$0x1f] %vm224, %v301
    %s303 = scalar_lea.vmem %s0, 16
    %v304 = vld [vmem:[%s303] sm:$0x1f]
    %v305 = vld [vmem:[%s2 + $0x2] sm:$0x1]
    %v306 = vld [vmem:[%s1 + $0x2] sm:$0x1]
    %v307 = vperm.slane %v306, 0
    %vm308 = vcmp.eq.s32.totalorder %v307, %v34
    %v309 = vsel %vm308, 1, 0
    %v310 = vcvt.s32.f32 %v309
    %v311 = vld [vmem:[#allocation4] sm:$0x1f]
    %v313 = vsel %vm199, %v311, 0
    %315 = vmatpush.msra.mxu0 0.0
    %316 = vmatpush.msra.mxu0 0.0
    %317 = vmatpush.msra.mxu0 0.0
    %318 = vmatpush.msra.mxu0 0.0
    %319 = vmatpush.msra.mxu0 0.0
    %320 = vmatpush.msra.mxu0 0.0
    %321 = vmatpush.msra.mxu0 0.0
    %322 = vmatpush.msra.mxu0 0.0
    %323 = vmatpush.msra.mxu0 0.0
    %324 = vmatpush.msra.mxu0 0.0
    %325 = vmatpush.msra.mxu0 0.0
    %326 = vmatpush.msra.mxu0 0.0
    %327 = vmatpush.msra.mxu0 0.0
    %328 = vmatpush.msra.mxu0 0.0
    %329 = vmatpush.msra.mxu0 0.0
    %330 = vmatpush.msra.mxu0 %v313
    %331 = vmatmul.f32.gmra.mxu0 %v197
    %v332 = vpop.f32.mrf.mxu0
    %v333 = vadd.f32 0.0, %v332
    %334 = vdwg.mxu0
    %v335 = vmul.f32 %v333, %v310
    %v336 = vsel %vm224, %v335, 0.0
    %v337 = vrot.slane %v336, 4
    %v338 = vadd.f32 %v336, %v337
    %v339 = vrot.slane %v338, 2
    %v340 = vadd.f32 %v338, %v339
    %v341 = vrot.slane %v340, 1
    %v342 = vadd.f32 %v340, %v341
    %v343 = vmul.f32 %v310, %v304
    %v344 = vsel %vm224, %v343, 0.0
    %v345 = vrot.slane %v344, 4
    %v346 = vadd.f32 %v344, %v345
    %v347 = vrot.slane %v346, 2
    %v348 = vadd.f32 %v346, %v347
    %v349 = vrot.slane %v348, 1
    %v350 = vadd.f32 %v348, %v349
    %v351 = vld [vmem:[#allocation3] sm:$0x1]
    %v352 = vadd.f32 %v342, %v350
    %v353 = vmul.f32 %v352, %v305
    %v354 = vadd.f32 %v351, %v353
    %355 = vst.msk [vmem:[#allocation3] sm:$0x1] %vm244, %v354
    %356 = vst.msk [vmem:[#allocation4] sm:$0x1f] %vm224, %v310
    %vm357 = vcmp.gt.f32.partialorder %v305, 0.0
    %v358 = vld [vmem:[#allocation5] sm:$0x1f]
    %v359 = vsel %vm357, 1, 0
    %v360 = vperm.slane %v359, 0
    %vm361 = vcmp.eq.s32.totalorder %v360, 1
    %v362 = vsel %vm361, %v310, %v358
    %363 = vst.msk [vmem:[#allocation5] sm:$0x1f] %vm224, %v362
    %v364 = vld [vmem:[#allocation2] sm:$0x1f]
    %v365 = vsel %vm224, %v364, -inf
    %v366 = vrot.slane %v365, 4
    %v367 = vmax.f32 %v365, %v366
    %v368 = vrot.slane %v367, 2
    %v369 = vmax.f32 %v367, %v368
    %v370 = vrot.slane %v369, 1
    %v371 = vmax.f32 %v369, %v370
    %v372 = vsub.f32 %v364, %v371
    %v373 = vmul.f32 %v372, 1.442695
    %v374 = vpow.pop %v373
    %v376 = vsel %vm199, %v374, 0
    %378 = vmatpush.msra.mxu0 0.0
    %379 = vmatpush.msra.mxu0 0.0
    %380 = vmatpush.msra.mxu0 0.0
    %381 = vmatpush.msra.mxu0 0.0
    %382 = vmatpush.msra.mxu0 0.0
    %383 = vmatpush.msra.mxu0 0.0
    %384 = vmatpush.msra.mxu0 0.0
    %385 = vmatpush.msra.mxu0 0.0
    %386 = vmatpush.msra.mxu0 0.0
    %387 = vmatpush.msra.mxu0 0.0
    %388 = vmatpush.msra.mxu0 0.0
    %389 = vmatpush.msra.mxu0 0.0
    %390 = vmatpush.msra.mxu0 0.0
    %391 = vmatpush.msra.mxu0 0.0
    %392 = vmatpush.msra.mxu0 0.0
    %393 = vmatpush.msra.mxu0 %v376
    %394 = vmatmul.f32.gmra.mxu0 %v266
    %v395 = vpop.f32.mrf.mxu0
    %v396 = vadd.f32 0.0, %v395
    %397 = vdwg.mxu0
    %v398 = vlog2.pop %v396
    %v399 = vmul.f32 %v398, 0.6931472
    %v400 = vadd.f32 %v399, %v296
    %v401 = vadd.f32 %v400, %v371
    %v402 = vadd.f32 %v401, %v304
    %v403 = vsel %vm361, %v402, %v364
    %404 = vst.msk [vmem:[#allocation2] sm:$0x1f] %vm224, %v403
    %s405 = scalar_lea.vmem %s0, 24
    %v406 = vld [vmem:[%s405] sm:$0x1f]
    %v407 = vld [vmem:[%s2 + $0x3] sm:$0x1]
    %v408 = vld [vmem:[%s1 + $0x3] sm:$0x1]
    %v409 = vperm.slane %v408, 0
    %vm410 = vcmp.eq.s32.totalorder %v409, %v34
    %v411 = vsel %vm410, 1, 0
    %v412 = vcvt.s32.f32 %v411
    %v413 = vld [vmem:[#allocation4] sm:$0x1f]
    %v415 = vsel %vm199, %v413, 0
    %417 = vmatpush.msra.mxu0 0.0
    %418 = vmatpush.msra.mxu0 0.0
    %419 = vmatpush.msra.mxu0 0.0
    %420 = vmatpush.msra.mxu0 0.0
    %421 = vmatpush.msra.mxu0 0.0
    %422 = vmatpush.msra.mxu0 0.0
    %423 = vmatpush.msra.mxu0 0.0
    %424 = vmatpush.msra.mxu0 0.0
    %425 = vmatpush.msra.mxu0 0.0
    %426 = vmatpush.msra.mxu0 0.0
    %427 = vmatpush.msra.mxu0 0.0
    %428 = vmatpush.msra.mxu0 0.0
    %429 = vmatpush.msra.mxu0 0.0
    %430 = vmatpush.msra.mxu0 0.0
    %431 = vmatpush.msra.mxu0 0.0
    %432 = vmatpush.msra.mxu0 %v415
    %433 = vmatmul.f32.gmra.mxu0 %v197
    %v434 = vpop.f32.mrf.mxu0
    %v435 = vadd.f32 0.0, %v434
    %436 = vdwg.mxu0
    %v437 = vmul.f32 %v435, %v412
    %v438 = vsel %vm224, %v437, 0.0
    %v439 = vrot.slane %v438, 4
    %v440 = vadd.f32 %v438, %v439
    %v441 = vrot.slane %v440, 2
    %v442 = vadd.f32 %v440, %v441
    %v443 = vrot.slane %v442, 1
    %v444 = vadd.f32 %v442, %v443
    %v445 = vmul.f32 %v412, %v406
    %v446 = vsel %vm224, %v445, 0.0
    %v447 = vrot.slane %v446, 4
    %v448 = vadd.f32 %v446, %v447
    %v449 = vrot.slane %v448, 2
    %v450 = vadd.f32 %v448, %v449
    %v451 = vrot.slane %v450, 1
    %v452 = vadd.f32 %v450, %v451
    %v453 = vld [vmem:[#allocation3] sm:$0x1]
    %v454 = vadd.f32 %v444, %v452
    %v455 = vmul.f32 %v454, %v407
    %v456 = vadd.f32 %v453, %v455
    %457 = vst.msk [vmem:[#allocation3] sm:$0x1] %vm244, %v456
    %458 = vst.msk [vmem:[#allocation4] sm:$0x1f] %vm224, %v412
    %vm459 = vcmp.gt.f32.partialorder %v407, 0.0
    %v460 = vld [vmem:[#allocation5] sm:$0x1f]
    %v461 = vsel %vm459, 1, 0
    %v462 = vperm.slane %v461, 0
    %vm463 = vcmp.eq.s32.totalorder %v462, 1
    %v464 = vsel %vm463, %v412, %v460
    %465 = vst.msk [vmem:[#allocation5] sm:$0x1f] %vm224, %v464
    %v466 = vld [vmem:[#allocation2] sm:$0x1f]
    %v467 = vsel %vm224, %v466, -inf
    %v468 = vrot.slane %v467, 4
    %v469 = vmax.f32 %v467, %v468
    %v470 = vrot.slane %v469, 2
    %v471 = vmax.f32 %v469, %v470
    %v472 = vrot.slane %v471, 1
    %v473 = vmax.f32 %v471, %v472
    %v474 = vsub.f32 %v466, %v473
    %v475 = vmul.f32 %v474, 1.442695
    %v476 = vpow.pop %v475
    %v478 = vsel %vm199, %v476, 0
    %480 = vmatpush.msra.mxu0 0.0
    %481 = vmatpush.msra.mxu0 0.0
    %482 = vmatpush.msra.mxu0 0.0
    %483 = vmatpush.msra.mxu0 0.0
    %484 = vmatpush.msra.mxu0 0.0
    %485 = vmatpush.msra.mxu0 0.0
    %486 = vmatpush.msra.mxu0 0.0
    %487 = vmatpush.msra.mxu0 0.0
    %488 = vmatpush.msra.mxu0 0.0
    %489 = vmatpush.msra.mxu0 0.0
    %490 = vmatpush.msra.mxu0 0.0
    %491 = vmatpush.msra.mxu0 0.0
    %492 = vmatpush.msra.mxu0 0.0
    %493 = vmatpush.msra.mxu0 0.0
    %494 = vmatpush.msra.mxu0 0.0
    %495 = vmatpush.msra.mxu0 %v478
    %496 = vmatmul.f32.gmra.mxu0 %v266
    %v497 = vpop.f32.mrf.mxu0
    %v498 = vadd.f32 0.0, %v497
    %499 = vdwg.mxu0
    %v500 = vlog2.pop %v498
    %v501 = vmul.f32 %v500, 0.6931472
    %v502 = vadd.f32 %v501, %v296
    %v503 = vadd.f32 %v502, %v473
    %v504 = vadd.f32 %v503, %v406
    %v505 = vsel %vm463, %v504, %v466
    %506 = vst.msk [vmem:[#allocation2] sm:$0x1f] %vm224, %v505
    %s507 = scalar_lea.vmem %s0, 32
    %v508 = vld [vmem:[%s507] sm:$0x1f]
    %v509 = vld [vmem:[%s2 + $0x4] sm:$0x1]
    %v510 = vld [vmem:[%s1 + $0x4] sm:$0x1]
    %v511 = vperm.slane %v510, 0
    %vm512 = vcmp.eq.s32.totalorder %v511, %v34
    %v513 = vsel %vm512, 1, 0
    %v514 = vcvt.s32.f32 %v513
    %v515 = vld [vmem:[#allocation4] sm:$0x1f]
    %v517 = vsel %vm199, %v515, 0
    %519 = vmatpush.msra.mxu0 0.0
    %520 = vmatpush.msra.mxu0 0.0
    %521 = vmatpush.msra.mxu0 0.0
    %522 = vmatpush.msra.mxu0 0.0
    %523 = vmatpush.msra.mxu0 0.0
    %524 = vmatpush.msra.mxu0 0.0
    %525 = vmatpush.msra.mxu0 0.0
    %526 = vmatpush.msra.mxu0 0.0
    %527 = vmatpush.msra.mxu0 0.0
    %528 = vmatpush.msra.mxu0 0.0
    %529 = vmatpush.msra.mxu0 0.0
    %530 = vmatpush.msra.mxu0 0.0
    %531 = vmatpush.msra.mxu0 0.0
    %532 = vmatpush.msra.mxu0 0.0
    %533 = vmatpush.msra.mxu0 0.0
    %534 = vmatpush.msra.mxu0 %v517
    %535 = vmatmul.f32.gmra.mxu0 %v197
    %v536 = vpop.f32.mrf.mxu0
    %v537 = vadd.f32 0.0, %v536
    %538 = vdwg.mxu0
    %v539 = vmul.f32 %v537, %v514
    %v540 = vsel %vm224, %v539, 0.0
    %v541 = vrot.slane %v540, 4
    %v542 = vadd.f32 %v540, %v541
    %v543 = vrot.slane %v542, 2
    %v544 = vadd.f32 %v542, %v543
    %v545 = vrot.slane %v544, 1
    %v546 = vadd.f32 %v544, %v545
    %v547 = vmul.f32 %v514, %v508
    %v548 = vsel %vm224, %v547, 0.0
    %v549 = vrot.slane %v548, 4
    %v550 = vadd.f32 %v548, %v549
    %v551 = vrot.slane %v550, 2
    %v552 = vadd.f32 %v550, %v551
    %v553 = vrot.slane %v552, 1
    %v554 = vadd.f32 %v552, %v553
    %v555 = vld [vmem:[#allocation3] sm:$0x1]
    %v556 = vadd.f32 %v546, %v554
    %v557 = vmul.f32 %v556, %v509
    %v558 = vadd.f32 %v555, %v557
    %559 = vst.msk [vmem:[#allocation3] sm:$0x1] %vm244, %v558
    %560 = vst.msk [vmem:[#allocation4] sm:$0x1f] %vm224, %v514
    %vm561 = vcmp.gt.f32.partialorder %v509, 0.0
    %v562 = vld [vmem:[#allocation5] sm:$0x1f]
    %v563 = vsel %vm561, 1, 0
    %v564 = vperm.slane %v563, 0
    %vm565 = vcmp.eq.s32.totalorder %v564, 1
    %v566 = vsel %vm565, %v514, %v562
    %567 = vst.msk [vmem:[#allocation5] sm:$0x1f] %vm224, %v566
    %v568 = vld [vmem:[#allocation2] sm:$0x1f]
    %v569 = vsel %vm224, %v568, -inf
    %v570 = vrot.slane %v569, 4
    %v571 = vmax.f32 %v569, %v570
    %v572 = vrot.slane %v571, 2
    %v573 = vmax.f32 %v571, %v572
    %v574 = vrot.slane %v573, 1
    %v575 = vmax.f32 %v573, %v574
    %v576 = vsub.f32 %v568, %v575
    %v577 = vmul.f32 %v576, 1.442695
    %v578 = vpow.pop %v577
    %v580 = vsel %vm199, %v578, 0
    %582 = vmatpush.msra.mxu0 0.0
    %583 = vmatpush.msra.mxu0 0.0
    %584 = vmatpush.msra.mxu0 0.0
    %585 = vmatpush.msra.mxu0 0.0
    %586 = vmatpush.msra.mxu0 0.0
    %587 = vmatpush.msra.mxu0 0.0
    %588 = vmatpush.msra.mxu0 0.0
    %589 = vmatpush.msra.mxu0 0.0
    %590 = vmatpush.msra.mxu0 0.0
    %591 = vmatpush.msra.mxu0 0.0
    %592 = vmatpush.msra.mxu0 0.0
    %593 = vmatpush.msra.mxu0 0.0
    %594 = vmatpush.msra.mxu0 0.0
    %595 = vmatpush.msra.mxu0 0.0
    %596 = vmatpush.msra.mxu0 0.0
    %597 = vmatpush.msra.mxu0 %v580
    %598 = vmatmul.f32.gmra.mxu0 %v266
    %v599 = vpop.f32.mrf.mxu0
    %v600 = vadd.f32 0.0, %v599
    %601 = vdwg.mxu0
    %v602 = vlog2.pop %v600
    %v603 = vmul.f32 %v602, 0.6931472
    %v604 = vadd.f32 %v603, %v296
    %v605 = vadd.f32 %v604, %v575
    %v606 = vadd.f32 %v605, %v508
    %v607 = vsel %vm565, %v606, %v568
    %608 = vst.msk [vmem:[#allocation2] sm:$0x1f] %vm224, %v607
    %s609 = scalar_lea.vmem %s0, 40
    %v610 = vld [vmem:[%s609] sm:$0x1f]
    %v611 = vld [vmem:[%s2 + $0x5] sm:$0x1]
    %v612 = vld [vmem:[%s1 + $0x5] sm:$0x1]
    %v613 = vperm.slane %v612, 0
    %vm614 = vcmp.eq.s32.totalorder %v613, %v34
    %v615 = vsel %vm614, 1, 0
    %v616 = vcvt.s32.f32 %v615
    %v617 = vld [vmem:[#allocation4] sm:$0x1f]
    %v619 = vsel %vm199, %v617, 0
    %621 = vmatpush.msra.mxu0 0.0
    %622 = vmatpush.msra.mxu0 0.0
    %623 = vmatpush.msra.mxu0 0.0
    %624 = vmatpush.msra.mxu0 0.0
    %625 = vmatpush.msra.mxu0 0.0
    %626 = vmatpush.msra.mxu0 0.0
    %627 = vmatpush.msra.mxu0 0.0
    %628 = vmatpush.msra.mxu0 0.0
    %629 = vmatpush.msra.mxu0 0.0
    %630 = vmatpush.msra.mxu0 0.0
    %631 = vmatpush.msra.mxu0 0.0
    %632 = vmatpush.msra.mxu0 0.0
    %633 = vmatpush.msra.mxu0 0.0
    %634 = vmatpush.msra.mxu0 0.0
    %635 = vmatpush.msra.mxu0 0.0
    %636 = vmatpush.msra.mxu0 %v619
    %637 = vmatmul.f32.gmra.mxu0 %v197
    %v638 = vpop.f32.mrf.mxu0
    %v639 = vadd.f32 0.0, %v638
    %640 = vdwg.mxu0
    %v641 = vmul.f32 %v639, %v616
    %v642 = vsel %vm224, %v641, 0.0
    %v643 = vrot.slane %v642, 4
    %v644 = vadd.f32 %v642, %v643
    %v645 = vrot.slane %v644, 2
    %v646 = vadd.f32 %v644, %v645
    %v647 = vrot.slane %v646, 1
    %v648 = vadd.f32 %v646, %v647
    %v649 = vmul.f32 %v616, %v610
    %v650 = vsel %vm224, %v649, 0.0
    %v651 = vrot.slane %v650, 4
    %v652 = vadd.f32 %v650, %v651
    %v653 = vrot.slane %v652, 2
    %v654 = vadd.f32 %v652, %v653
    %v655 = vrot.slane %v654, 1
    %v656 = vadd.f32 %v654, %v655
    %v657 = vld [vmem:[#allocation3] sm:$0x1]
    %v658 = vadd.f32 %v648, %v656
    %v659 = vmul.f32 %v658, %v611
    %v660 = vadd.f32 %v657, %v659
    %661 = vst.msk [vmem:[#allocation3] sm:$0x1] %vm244, %v660
    %662 = vst.msk [vmem:[#allocation4] sm:$0x1f] %vm224, %v616
    %vm663 = vcmp.gt.f32.partialorder %v611, 0.0
    %v664 = vld [vmem:[#allocation5] sm:$0x1f]
    %v665 = vsel %vm663, 1, 0
    %v666 = vperm.slane %v665, 0
    %vm667 = vcmp.eq.s32.totalorder %v666, 1
    %v668 = vsel %vm667, %v616, %v664
    %669 = vst.msk [vmem:[#allocation5] sm:$0x1f] %vm224, %v668
    %v670 = vld [vmem:[#allocation2] sm:$0x1f]
    %v671 = vsel %vm224, %v670, -inf
    %v672 = vrot.slane %v671, 4
    %v673 = vmax.f32 %v671, %v672
    %v674 = vrot.slane %v673, 2
    %v675 = vmax.f32 %v673, %v674
    %v676 = vrot.slane %v675, 1
    %v677 = vmax.f32 %v675, %v676
    %v678 = vsub.f32 %v670, %v677
    %v679 = vmul.f32 %v678, 1.442695
    %v680 = vpow.pop %v679
    %v682 = vsel %vm199, %v680, 0
    %684 = vmatpush.msra.mxu0 0.0
    %685 = vmatpush.msra.mxu0 0.0
    %686 = vmatpush.msra.mxu0 0.0
    %687 = vmatpush.msra.mxu0 0.0
    %688 = vmatpush.msra.mxu0 0.0
    %689 = vmatpush.msra.mxu0 0.0
    %690 = vmatpush.msra.mxu0 0.0
    %691 = vmatpush.msra.mxu0 0.0
    %692 = vmatpush.msra.mxu0 0.0
    %693 = vmatpush.msra.mxu0 0.0
    %694 = vmatpush.msra.mxu0 0.0
    %695 = vmatpush.msra.mxu0 0.0
    %696 = vmatpush.msra.mxu0 0.0
    %697 = vmatpush.msra.mxu0 0.0
    %698 = vmatpush.msra.mxu0 0.0
    %699 = vmatpush.msra.mxu0 %v682
    %700 = vmatmul.f32.gmra.mxu0 %v266
    %v701 = vpop.f32.mrf.mxu0
    %v702 = vadd.f32 0.0, %v701
    %703 = vdwg.mxu0
    %v704 = vlog2.pop %v702
    %v705 = vmul.f32 %v704, 0.6931472
    %v706 = vadd.f32 %v705, %v296
    %v707 = vadd.f32 %v706, %v677
    %v708 = vadd.f32 %v707, %v610
    %v709 = vsel %vm667, %v708, %v670
    %710 = vst.msk [vmem:[#allocation2] sm:$0x1f] %vm224, %v709
    %s711 = scalar_lea.vmem %s0, 48
    %v712 = vld [vmem:[%s711] sm:$0x1f]
    %v713 = vld [vmem:[%s2 + $0x6] sm:$0x1]
    %v714 = vld [vmem:[%s1 + $0x6] sm:$0x1]
    %v715 = vperm.slane %v714, 0
    %vm716 = vcmp.eq.s32.totalorder %v715, %v34
    %v717 = vsel %vm716, 1, 0
    %v718 = vcvt.s32.f32 %v717
    %v719 = vld [vmem:[#allocation4] sm:$0x1f]
    %v721 = vsel %vm199, %v719, 0
    %723 = vmatpush.msra.mxu0 0.0
    %724 = vmatpush.msra.mxu0 0.0
    %725 = vmatpush.msra.mxu0 0.0
    %726 = vmatpush.msra.mxu0 0.0
    %727 = vmatpush.msra.mxu0 0.0
    %728 = vmatpush.msra.mxu0 0.0
    %729 = vmatpush.msra.mxu0 0.0
    %730 = vmatpush.msra.mxu0 0.0
    %731 = vmatpush.msra.mxu0 0.0
    %732 = vmatpush.msra.mxu0 0.0
    %733 = vmatpush.msra.mxu0 0.0
    %734 = vmatpush.msra.mxu0 0.0
    %735 = vmatpush.msra.mxu0 0.0
    %736 = vmatpush.msra.mxu0 0.0
    %737 = vmatpush.msra.mxu0 0.0
    %738 = vmatpush.msra.mxu0 %v721
    %739 = vmatmul.f32.gmra.mxu0 %v197
    %v740 = vpop.f32.mrf.mxu0
    %v741 = vadd.f32 0.0, %v740
    %742 = vdwg.mxu0
    %v743 = vmul.f32 %v741, %v718
    %v744 = vsel %vm224, %v743, 0.0
    %v745 = vrot.slane %v744, 4
    %v746 = vadd.f32 %v744, %v745
    %v747 = vrot.slane %v746, 2
    %v748 = vadd.f32 %v746, %v747
    %v749 = vrot.slane %v748, 1
    %v750 = vadd.f32 %v748, %v749
    %v751 = vmul.f32 %v718, %v712
    %v752 = vsel %vm224, %v751, 0.0
    %v753 = vrot.slane %v752, 4
    %v754 = vadd.f32 %v752, %v753
    %v755 = vrot.slane %v754, 2
    %v756 = vadd.f32 %v754, %v755
    %v757 = vrot.slane %v756, 1
    %v758 = vadd.f32 %v756, %v757
    %v759 = vld [vmem:[#allocation3] sm:$0x1]
    %v760 = vadd.f32 %v750, %v758
    %v761 = vmul.f32 %v760, %v713
    %v762 = vadd.f32 %v759, %v761
    %763 = vst.msk [vmem:[#allocation3] sm:$0x1] %vm244, %v762
    %764 = vst.msk [vmem:[#allocation4] sm:$0x1f] %vm224, %v718
    %vm765 = vcmp.gt.f32.partialorder %v713, 0.0
    %v766 = vld [vmem:[#allocation5] sm:$0x1f]
    %v767 = vsel %vm765, 1, 0
    %v768 = vperm.slane %v767, 0
    %vm769 = vcmp.eq.s32.totalorder %v768, 1
    %v770 = vsel %vm769, %v718, %v766
    %771 = vst.msk [vmem:[#allocation5] sm:$0x1f] %vm224, %v770
    %v772 = vld [vmem:[#allocation2] sm:$0x1f]
    %v773 = vsel %vm224, %v772, -inf
    %v774 = vrot.slane %v773, 4
    %v775 = vmax.f32 %v773, %v774
    %v776 = vrot.slane %v775, 2
    %v777 = vmax.f32 %v775, %v776
    %v778 = vrot.slane %v777, 1
    %v779 = vmax.f32 %v777, %v778
    %v780 = vsub.f32 %v772, %v779
    %v781 = vmul.f32 %v780, 1.442695
    %v782 = vpow.pop %v781
    %v784 = vsel %vm199, %v782, 0
    %786 = vmatpush.msra.mxu0 0.0
    %787 = vmatpush.msra.mxu0 0.0
    %788 = vmatpush.msra.mxu0 0.0
    %789 = vmatpush.msra.mxu0 0.0
    %790 = vmatpush.msra.mxu0 0.0
    %791 = vmatpush.msra.mxu0 0.0
    %792 = vmatpush.msra.mxu0 0.0
    %793 = vmatpush.msra.mxu0 0.0
    %794 = vmatpush.msra.mxu0 0.0
    %795 = vmatpush.msra.mxu0 0.0
    %796 = vmatpush.msra.mxu0 0.0
    %797 = vmatpush.msra.mxu0 0.0
    %798 = vmatpush.msra.mxu0 0.0
    %799 = vmatpush.msra.mxu0 0.0
    %800 = vmatpush.msra.mxu0 0.0
    %801 = vmatpush.msra.mxu0 %v784
    %802 = vmatmul.f32.gmra.mxu0 %v266
    %v803 = vpop.f32.mrf.mxu0
    %v804 = vadd.f32 0.0, %v803
    %805 = vdwg.mxu0
    %v806 = vlog2.pop %v804
    %v807 = vmul.f32 %v806, 0.6931472
    %v808 = vadd.f32 %v807, %v296
    %v809 = vadd.f32 %v808, %v779
    %v810 = vadd.f32 %v809, %v712
    %v811 = vsel %vm769, %v810, %v772
    %812 = vst.msk [vmem:[#allocation2] sm:$0x1f] %vm224, %v811
    %s813 = scalar_lea.vmem %s0, 56
    %v814 = vld [vmem:[%s813] sm:$0x1f]
    %v815 = vld [vmem:[%s2 + $0x7] sm:$0x1]
    %v816 = vld [vmem:[%s1 + $0x7] sm:$0x1]
    %v817 = vperm.slane %v816, 0
    %vm818 = vcmp.eq.s32.totalorder %v817, %v34
    %v819 = vsel %vm818, 1, 0
    %v820 = vcvt.s32.f32 %v819
    %v821 = vld [vmem:[#allocation4] sm:$0x1f]
    %v823 = vsel %vm199, %v821, 0
    %825 = vmatpush.msra.mxu0 0.0
    %826 = vmatpush.msra.mxu0 0.0
    %827 = vmatpush.msra.mxu0 0.0
    %828 = vmatpush.msra.mxu0 0.0
    %829 = vmatpush.msra.mxu0 0.0
    %830 = vmatpush.msra.mxu0 0.0
    %831 = vmatpush.msra.mxu0 0.0
    %832 = vmatpush.msra.mxu0 0.0
    %833 = vmatpush.msra.mxu0 0.0
    %834 = vmatpush.msra.mxu0 0.0
    %835 = vmatpush.msra.mxu0 0.0
    %836 = vmatpush.msra.mxu0 0.0
    %837 = vmatpush.msra.mxu0 0.0
    %838 = vmatpush.msra.mxu0 0.0
    %839 = vmatpush.msra.mxu0 0.0
    %840 = vmatpush.msra.mxu0 %v823
    %841 = vmatmul.f32.gmra.mxu0 %v197
    %v842 = vpop.f32.mrf.mxu0
    %v843 = vadd.f32 0.0, %v842
    %844 = vdwg.mxu0
    %v845 = vmul.f32 %v843, %v820
    %v846 = vsel %vm224, %v845, 0.0
    %v847 = vrot.slane %v846, 4
    %v848 = vadd.f32 %v846, %v847
    %v849 = vrot.slane %v848, 2
    %v850 = vadd.f32 %v848, %v849
    %v851 = vrot.slane %v850, 1
    %v852 = vadd.f32 %v850, %v851
    %v853 = vmul.f32 %v820, %v814
    %v854 = vsel %vm224, %v853, 0.0
    %v855 = vrot.slane %v854, 4
    %v856 = vadd.f32 %v854, %v855
    %v857 = vrot.slane %v856, 2
    %v858 = vadd.f32 %v856, %v857
    %v859 = vrot.slane %v858, 1
    %v860 = vadd.f32 %v858, %v859
    %v861 = vld [vmem:[#allocation3] sm:$0x1]
    %v862 = vadd.f32 %v852, %v860
    %v863 = vmul.f32 %v862, %v815
    %v864 = vadd.f32 %v861, %v863
    %865 = vst.msk [vmem:[#allocation3] sm:$0x1] %vm244, %v864
    %866 = vst.msk [vmem:[#allocation4] sm:$0x1f] %vm224, %v820
    %vm867 = vcmp.gt.f32.partialorder %v815, 0.0
    %v868 = vld [vmem:[#allocation5] sm:$0x1f]
    %v869 = vsel %vm867, 1, 0
    %v870 = vperm.slane %v869, 0
    %vm871 = vcmp.eq.s32.totalorder %v870, 1
    %v872 = vsel %vm871, %v820, %v868
    %873 = vst.msk [vmem:[#allocation5] sm:$0x1f] %vm224, %v872
    %v874 = vld [vmem:[#allocation2] sm:$0x1f]
    %v875 = vsel %vm224, %v874, -inf
    %v876 = vrot.slane %v875, 4
    %v877 = vmax.f32 %v875, %v876
    %v878 = vrot.slane %v877, 2
    %v879 = vmax.f32 %v877, %v878
    %v880 = vrot.slane %v879, 1
    %v881 = vmax.f32 %v879, %v880
    %v882 = vsub.f32 %v874, %v881
    %v883 = vmul.f32 %v882, 1.442695
    %v884 = vpow.pop %v883
    %v886 = vsel %vm199, %v884, 0
    %888 = vmatpush.msra.mxu0 0.0
    %889 = vmatpush.msra.mxu0 0.0
    %890 = vmatpush.msra.mxu0 0.0
    %891 = vmatpush.msra.mxu0 0.0
    %892 = vmatpush.msra.mxu0 0.0
    %893 = vmatpush.msra.mxu0 0.0
    %894 = vmatpush.msra.mxu0 0.0
    %895 = vmatpush.msra.mxu0 0.0
    %896 = vmatpush.msra.mxu0 0.0
    %897 = vmatpush.msra.mxu0 0.0
    %898 = vmatpush.msra.mxu0 0.0
    %899 = vmatpush.msra.mxu0 0.0
    %900 = vmatpush.msra.mxu0 0.0
    %901 = vmatpush.msra.mxu0 0.0
    %902 = vmatpush.msra.mxu0 0.0
    %903 = vmatpush.msra.mxu0 %v886
    %904 = vmatmul.f32.gmra.mxu0 %v266
    %v905 = vpop.f32.mrf.mxu0
    %v906 = vadd.f32 0.0, %v905
    %907 = vdwg.mxu0
    %v908 = vlog2.pop %v906
    %v909 = vmul.f32 %v908, 0.6931472
    %v910 = vadd.f32 %v909, %v296
    %v911 = vadd.f32 %v910, %v881
    %v912 = vadd.f32 %v911, %v814
    %v913 = vsel %vm871, %v912, %v874
    %914 = vst.msk [vmem:[#allocation2] sm:$0x1f] %vm224, %v913
    // Predicated region
    $region42: #{tpu_custom_call.1} parent=1 // pred_check
      %p915 = pneg %p35
    $region43: #{tpu_custom_call.1} parent=1 // pred_check_branch
      %917 = sbr.rel (%p915) target = $region45
    $region44: #{tpu_custom_call.1} parent=1 // pred_region
      %v918 = vld [vmem:[%s7] sm:$0x1f]
      %v919 = vld [vmem:[#allocation3] sm:$0x1]
      %v920 = vld [vmem:[#allocation5] sm:$0x1f]
      %922 = vset.pattern.permute.xlu0 0
      %923 = vperm.xlu0 %922, %v918
      %v924 = vpop.permute.xlu0 %923
      %v926 = vmul.f32 %v920, %v924
      %v927 = vsel %vm224, %v926, 0.0
      %v928 = vrot.slane %v927, 4
      %v929 = vadd.f32 %v927, %v928
      %v930 = vrot.slane %v929, 2
      %v931 = vadd.f32 %v929, %v930
      %v932 = vrot.slane %v931, 1
      %v933 = vadd.f32 %v931, %v932
      %v934 = vadd.f32 %v919, %v933
      %v935 = vld [vmem:[#allocation2] sm:$0x1f]
      %v936 = vadd.f32 %v935, %v924
      %v937 = vsel %vm224, %v936, -inf
      %v938 = vrot.slane %v937, 4
      %v939 = vmax.f32 %v937, %v938
      %v940 = vrot.slane %v939, 2
      %v941 = vmax.f32 %v939, %v940
      %v942 = vrot.slane %v941, 1
      %v943 = vmax.f32 %v941, %v942
      %v944 = vsub.f32 %v936, %v943
      %v945 = vmul.f32 %v944, 1.442695
      %v946 = vpow.pop %v945
      %v947 = vsel %vm224, %v946, 0.0
      %v948 = vrot.slane %v947, 4
      %v949 = vadd.f32 %v947, %v948
      %v950 = vrot.slane %v949, 2
      %v951 = vadd.f32 %v949, %v950
      %v952 = vrot.slane %v951, 1
      %v953 = vadd.f32 %v951, %v952
      %v954 = vlog2.pop %v953
      %v955 = vmul.f32 %v954, 0.6931472
      %v956 = vadd.f32 %v955, %v943
      %v957 = vsub.f32 %v956, %v934
      %958 = vst.msk [vmem:[#allocation6] sm:$0x1] %vm244, %v957
    $region45: #{tpu_custom_call.1} parent=1 // pred_fallthru
      _
    // Predicated region
    $region46: #{tpu_custom_call.1} parent=1 // pred_check
      _
    $region47: #{tpu_custom_call.1} parent=1 // pred_check_branch
      %960 = sbr.rel (0) target = $region49
    $region48: #{tpu_custom_call.1} parent=1 // pred_region
      %962 = vsyncadd [#allocation7], 0
      %s964 = sshll.u32 [#allocation6], 4
      %s965 = int_to_ptr.vmem [resolvable:$true] %s964
      %s966 = sshll.u32 %s8, 4
      %s967 = int_to_ptr.hbm [resolvable:$true] %s966
      %969 = dma.vmem_to_hbm [thread:$0]  %s965, 16, %s967, [#allocation7]
    $region49: #{tpu_custom_call.1} parent=1 // pred_fallthru
      _
    // Predicated region
    $region50: #{tpu_custom_call.1} parent=1 // pred_check
      _
    $region51: #{tpu_custom_call.1} parent=1 // pred_check_branch
      %971 = sbr.rel (0) target = $region53
    $region52: #{tpu_custom_call.1} parent=1 // pred_region
      %973 = dma.done [#allocation7], 16
    $region53: #{tpu_custom_call.1} parent=1 // pred_fallthru
      _
    %974 = vsyncpa [#allocation7], 1

</llo_original>
